<compile_context>
chip_gen: v5e
topology: v5e:2x2
jax: 0.10.0
libtpu: 0.0.40
codegen_flags: <defaults>
</compile_context>

<pallas_src>
import jax
import jax.numpy as jnp
from jax import lax
from jax.experimental import pallas as pl
from jax.experimental.pallas import tpu as pltpu


def _ffscore_kernel(x_ref, res_ref, w1_ref, params_ref, b2_ref, out_ref):
    gb, n, d = x_ref.shape
    rows = gb * n

    p = params_ref[...]                 # (4, D) f32: [b1; gamma; beta; w2_row]
    b1 = p[0:1, :]
    gamma = p[1:2, :]
    beta = p[2:3, :]
    w2row = p[3:4, :]

    # ---- One big Linear(D, D) on the MXU for all Gb groups at once ----
    # (w1 is shared across groups, so the flattened (Gb*N, D) LHS is exact.)
    x2 = x_ref[...].reshape(rows, d)
    h = jnp.dot(x2.astype(jnp.bfloat16), w1_ref[...],
                preferred_element_type=jnp.float32) + b1          # (rows, D) f32

    # ---- LeakyReLU (negative_slope = 0.01) ----
    h = jnp.maximum(h, 0.01 * h)

    # ---- BatchNorm1d per group, training mode: biased variance, eps=1e-5 ----
    h3 = h.reshape(gb, n, d)
    inv_n = 1.0 / n
    mean = jnp.sum(h3, axis=1, keepdims=True) * inv_n              # (Gb, 1, D)
    diff = h3 - mean
    var = jnp.sum(diff * diff, axis=1, keepdims=True) * inv_n      # (Gb, 1, D)
    scale = gamma * lax.rsqrt(var + 1e-5)                          # gamma folded
    z = diff * scale + beta + res_ref[...]                         # (Gb, N, D)

    # ---- Linear(D, 1): lane-dense VPU mul + XLU lane reduce, then sigmoid ----
    y = jnp.sum(z * w2row, axis=-1) + b2_ref[0]                    # (Gb, N)
    sig = pl.reciprocal(1.0 + jnp.exp(-y), approx=True)            # exp->EUP, rcp->EUP
    out_ref[...] = sig.reshape(1, rows)                            # lane-dense store


def _pick_group_block(G, N, target_rows=256):
    """Largest divisor Gb of G with Gb*N <= target_rows (MXU-fill vs vreg cap)."""
    best = 1
    for gb in range(1, G + 1):
        if G % gb == 0 and gb * N <= target_rows:
            best = gb
    return best


@jax.jit
def feed_forward_score(x, residual, w1, b1, gamma, beta, w2, b2):
    """FeedForwardScore forward.

    x, residual : (G, N, D) or (N, D) float32 -- G independent score batches.
    w1          : (D, D), already transposed so h = x @ w1 + b1.
    b1, gamma, beta : (D,) or (1, D).
    w2          : (D,), (D, 1) or (1, D)  (weights of the D->1 Linear).
    b2          : scalar.
    Returns (G, N, 1) (or (N, 1) for 2-D input) float32 scores.
    """
    squeeze = x.ndim == 2
    if squeeze:
        x = x[None]
        residual = residual[None]
    G, N, D = x.shape

    Gb = _pick_group_block(G, N)        # Gb*N ~ 256 rows per step
    nb = G // Gb

    # Pack the four per-feature vectors into one (4, D) array -> single DMA.
    params = jnp.stack(
        [b1.reshape(D), gamma.reshape(D), beta.reshape(D), w2.reshape(D)],
        axis=0).astype(jnp.float32)
    b2s = jnp.asarray(b2, jnp.float32).reshape(1)       # scalar -> SMEM
    # In production w1 would be stored in bf16 already; the one-time cast here
    # halves the dominant per-step DMA.
    w1_bf16 = w1.astype(jnp.bfloat16)

    out = pl.pallas_call(
        _ffscore_kernel,
        # (nb, 1, Gb*N): one lane-dense row per grid step.
        out_shape=jax.ShapeDtypeStruct((nb, 1, Gb * N), jnp.float32),
        grid=(nb,),
        in_specs=[
            pl.BlockSpec((Gb, N, D), lambda g: (g, 0, 0)),          # x slab
            pl.BlockSpec((Gb, N, D), lambda g: (g, 0, 0)),          # residual slab
            pl.BlockSpec((D, D), lambda g: (0, 0)),                 # w1 (bf16, shared)
            pl.BlockSpec((4, D), lambda g: (0, 0)),                 # packed params
            pl.BlockSpec(memory_space=pltpu.MemorySpace.SMEM),      # b2 scalar
        ],
        out_specs=pl.BlockSpec((pl.Squeezed(), 1, Gb * N), lambda g: (g, 0, 0)),
        compiler_params=pltpu.CompilerParams(
            dimension_semantics=("parallel",)),
    )(x, residual, w1_bf16, params, b2s)

    # (nb, 1, Gb*N) is g-major / row-major -> plain metadata reshape.
    out = out.reshape(G, N, 1)
    return out[0] if squeeze else out


def _reference(x, residual, w1, b1, gamma, beta, w2, b2, mxu_bf16):
    """Pure-JAX reference for a single (N, D) group. Returns (N,)."""
    if mxu_bf16:
        h = jnp.dot(x.astype(jnp.bfloat16), w1.astype(jnp.bfloat16),
                    preferred_element_type=jnp.float32) + b1
    else:
        h = x @ w1 + b1
    h = jnp.maximum(h, 0.01 * h)
    mean = jnp.mean(h, axis=0, keepdims=True)
    var = jnp.mean((h - mean) ** 2, axis=0, keepdims=True)
    z = (h - mean) * (gamma * lax.rsqrt(var + 1e-5)) + beta + residual
    y = z @ w2 + b2
    return 1.0 / (1.0 + jnp.exp(-y))


if __name__ == "__main__":
    # Module hyperparams: D = dim * num_channels (feature width of the MLP).
    dim, num_channels = 32, 4
    D = dim * num_channels           # 128 -> lane aligned
    G, N = 64, 8                     # 64 independent score batches of 8 rows
                                     # -> Gb=32 (256 rows/step), grid=(2,)

    key = jax.random.PRNGKey(0)
    kx, kr, kw1, kb1, kg, kb, kw2, kb2 = jax.random.split(key, 8)

    x = jax.random.normal(kx, (G, N, D), dtype=jnp.float32)
    residual = jax.random.normal(kr, (G, N, D), dtype=jnp.float32)

    # Deterministic PyTorch-like uniform fan-in init; non-trivial BN affine.
    bound = 1.0 / (D ** 0.5)
    w1 = jax.random.uniform(kw1, (D, D), jnp.float32, -bound, bound)  # pre-transposed
    b1 = jax.random.uniform(kb1, (D,), jnp.float32, -bound, bound)
    gamma = 1.0 + 0.1 * jax.random.normal(kg, (D,), jnp.float32)
    beta = 0.1 * jax.random.normal(kb, (D,), jnp.float32)
    w2 = jax.random.uniform(kw2, (D,), jnp.float32, -bound, bound)    # row of the D->1 Linear
    b2 = jax.random.uniform(kb2, (), jnp.float32, -bound, bound)

    out = feed_forward_score(x, residual, w1, b1, gamma, beta, w2, b2)
    out = jax.block_until_ready(out)
    assert out.shape == (G, N, 1)
    scores = out[..., 0]

    # Tight check vs a reference using the same bf16-MXU / f32-accum recipe
    # (slack covers the approx-reciprocal sigmoid and reduction-order noise).
    ref_recipe = jax.vmap(
        lambda xg, rg: _reference(xg, rg, w1, b1, gamma, beta, w2, b2, True)
    )(x, residual)
    assert jnp.allclose(scores, ref_recipe, atol=2e-3, rtol=2e-3), (
        float(jnp.max(jnp.abs(scores - ref_recipe))))

    # Looser check vs the full-f32 (PyTorch-faithful) math.
    ref_f32 = jax.vmap(
        lambda xg, rg: _reference(xg, rg, w1, b1, gamma, beta, w2, b2, False)
    )(x, residual)
    assert jnp.allclose(scores, ref_f32, atol=1e-2, rtol=1e-2), (
        float(jnp.max(jnp.abs(scores - ref_f32))))

    print("KERNEL_OK")
</pallas_src>

<mosaic_0001>
module attributes {stable_mosaic.version = 11 : i64} {
  func.func @_ffscore_kernel(%arg0: i32, %arg1: memref<32x8x128xf32, #tpu.memory_space<vmem>>, %arg2: memref<32x8x128xf32, #tpu.memory_space<vmem>>, %arg3: memref<128x128xbf16, #tpu.memory_space<vmem>>, %arg4: memref<4x128xf32, #tpu.memory_space<vmem>>, %arg5: memref<1xf32, #tpu.memory_space<smem>>, %arg6: memref<1x1x256xf32, #tpu.memory_space<vmem>>) attributes {dimension_semantics = [#tpu.dimension_semantics<parallel>], iteration_bounds = array<i64: 2>, scalar_prefetch = 0 : i64, scratch_operands = 0 : i64, tpu.core_type = #tpu.core_type<tc>, window_params = [{transform_indices = @transform_0, window_bounds = array<i64: 32, 8, 128>}, {transform_indices = @transform_1, window_bounds = array<i64: 32, 8, 128>}, {pipeline_mode = #tpu.pipeline_mode<synchronous>, transform_indices = @transform_2, window_bounds = array<i64: 128, 128>}, {pipeline_mode = #tpu.pipeline_mode<synchronous>, transform_indices = @transform_3, window_bounds = array<i64: 4, 128>}, {transform_indices = @transform_4, window_bounds = array<i64: 1>}, {transform_indices = @transform_5, window_bounds = array<i64: 1, 1, 256>}]} {
    %c0 = arith.constant 0 : index
    %c0_0 = arith.constant 0 : index
    %0 = vector.load %arg4[%c0, %c0_0] : memref<4x128xf32, #tpu.memory_space<vmem>>, vector<4x128xf32>
    %1 = vector.extract_strided_slice %0 {offsets = [0, 0], sizes = [1, 128], strides = [1, 1]} : vector<4x128xf32> to vector<1x128xf32>
    %2 = vector.extract_strided_slice %0 {offsets = [1, 0], sizes = [1, 128], strides = [1, 1]} : vector<4x128xf32> to vector<1x128xf32>
    %3 = vector.extract_strided_slice %0 {offsets = [2, 0], sizes = [1, 128], strides = [1, 1]} : vector<4x128xf32> to vector<1x128xf32>
    %4 = vector.extract_strided_slice %0 {offsets = [3, 0], sizes = [1, 128], strides = [1, 1]} : vector<4x128xf32> to vector<1x128xf32>
    %c0_1 = arith.constant 0 : index
    %c0_2 = arith.constant 0 : index
    %c0_3 = arith.constant 0 : index
    %5 = vector.load %arg1[%c0_1, %c0_2, %c0_3] : memref<32x8x128xf32, #tpu.memory_space<vmem>>, vector<32x8x128xf32>
    %6 = vector.shape_cast %5 : vector<32x8x128xf32> to vector<256x128xf32>
    %7 = arith.truncf %6 : vector<256x128xf32> to vector<256x128xbf16>
    %c0_4 = arith.constant 0 : index
    %c0_5 = arith.constant 0 : index
    %8 = vector.load %arg3[%c0_4, %c0_5] : memref<128x128xbf16, #tpu.memory_space<vmem>>, vector<128x128xbf16>
    %cst = arith.constant dense<0.000000e+00> : vector<256x128xf32>
    %9 = tpu.matmul %7, %8, %cst {dimension_numbers = #tpu.dot_dimension_numbers<[1], [0], [0], [1], [0, 0, 1, 1], [], []>} : vector<256x128xbf16>, vector<128x128xbf16>, vector<256x128xf32> -> vector<256x128xf32>
    %10 = vector.broadcast %1 : vector<1x128xf32> to vector<256x128xf32>
    %11 = arith.addf %9, %10 : vector<256x128xf32>
    %cst_6 = arith.constant 0.00999999977 : f32
    %12 = vector.broadcast %cst_6 : f32 to vector<256x128xf32>
    %13 = arith.mulf %12, %11 : vector<256x128xf32>
    %14 = arith.maximumf %11, %13 : vector<256x128xf32>
    %15 = vector.shape_cast %14 : vector<256x128xf32> to vector<32x8x128xf32>
    %cst_7 = arith.constant dense<0.000000e+00> : vector<32x128xf32>
    %16 = vector.multi_reduction <add>, %15, %cst_7 [1] : vector<32x8x128xf32> to vector<32x128xf32>
    %17 = vector.shape_cast %16 : vector<32x128xf32> to vector<32x1x128xf32>
    %cst_8 = arith.constant 1.250000e-01 : f32
    %18 = vector.broadcast %cst_8 : f32 to vector<32x1x128xf32>
    %19 = arith.mulf %17, %18 : vector<32x1x128xf32>
    %20 = vector.broadcast %19 : vector<32x1x128xf32> to vector<32x8x128xf32>
    %21 = arith.subf %15, %20 : vector<32x8x128xf32>
    %22 = arith.mulf %21, %21 : vector<32x8x128xf32>
    %cst_9 = arith.constant dense<0.000000e+00> : vector<32x128xf32>
    %23 = vector.multi_reduction <add>, %22, %cst_9 [1] : vector<32x8x128xf32> to vector<32x128xf32>
    %24 = vector.shape_cast %23 : vector<32x128xf32> to vector<32x1x128xf32>
    %cst_10 = arith.constant 1.250000e-01 : f32
    %25 = vector.broadcast %cst_10 : f32 to vector<32x1x128xf32>
    %26 = arith.mulf %24, %25 : vector<32x1x128xf32>
    %cst_11 = arith.constant 9.99999974E-6 : f32
    %27 = vector.broadcast %cst_11 : f32 to vector<32x1x128xf32>
    %28 = arith.addf %26, %27 : vector<32x1x128xf32>
    %29 = math.rsqrt %28 : vector<32x1x128xf32>
    %30 = vector.shape_cast %2 : vector<1x128xf32> to vector<1x1x128xf32>
    %31 = vector.broadcast %30 : vector<1x1x128xf32> to vector<32x1x128xf32>
    %32 = arith.mulf %31, %29 : vector<32x1x128xf32>
    %33 = vector.broadcast %32 : vector<32x1x128xf32> to vector<32x8x128xf32>
    %34 = arith.mulf %21, %33 : vector<32x8x128xf32>
    %35 = vector.shape_cast %3 : vector<1x128xf32> to vector<1x1x128xf32>
    %36 = vector.broadcast %35 : vector<1x1x128xf32> to vector<32x8x128xf32>
    %37 = arith.addf %34, %36 : vector<32x8x128xf32>
    %c0_12 = arith.constant 0 : index
    %c0_13 = arith.constant 0 : index
    %c0_14 = arith.constant 0 : index
    %38 = vector.load %arg2[%c0_12, %c0_13, %c0_14] : memref<32x8x128xf32, #tpu.memory_space<vmem>>, vector<32x8x128xf32>
    %39 = arith.addf %37, %38 : vector<32x8x128xf32>
    %40 = vector.shape_cast %4 : vector<1x128xf32> to vector<1x1x128xf32>
    %41 = vector.broadcast %40 : vector<1x1x128xf32> to vector<32x8x128xf32>
    %42 = arith.mulf %39, %41 : vector<32x8x128xf32>
    %cst_15 = arith.constant dense<0.000000e+00> : vector<32x8xf32>
    %43 = vector.multi_reduction <add>, %42, %cst_15 [2] : vector<32x8x128xf32> to vector<32x8xf32>
    %c0_16 = arith.constant 0 : index
    %44 = memref.load %arg5[%c0_16] : memref<1xf32, #tpu.memory_space<smem>>
    %45 = vector.broadcast %44 : f32 to vector<32x8xf32>
    %46 = arith.addf %43, %45 : vector<32x8xf32>
    %cst_17 = arith.constant 0.000000e+00 : f32
    %47 = vector.broadcast %cst_17 : f32 to vector<32x8xf32>
    %48 = arith.subf %47, %46 : vector<32x8xf32>
    %49 = math.exp %48 : vector<32x8xf32>
    %cst_18 = arith.constant 1.000000e+00 : f32
    %50 = vector.broadcast %cst_18 : f32 to vector<32x8xf32>
    %51 = arith.addf %50, %49 : vector<32x8xf32>
    %52 = tpu.reciprocal %51 {approx = true} : vector<32x8xf32> -> vector<32x8xf32>
    %53 = vector.shape_cast %52 : vector<32x8xf32> to vector<1x256xf32>
    %c0_19 = arith.constant 0 : index
    %c0_20 = arith.constant 0 : index
    %c0_21 = arith.constant 0 : index
    %54 = vector.load %arg6[%c0_19, %c0_20, %c0_21] : memref<1x1x256xf32, #tpu.memory_space<vmem>>, vector<1x1x256xf32>
    %55 = vector.shape_cast %54 : vector<1x1x256xf32> to vector<1x256xf32>
    %56 = vector.shape_cast %53 : vector<1x256xf32> to vector<1x1x256xf32>
    tpu.vector_store %arg6[%c0_19, %c0_20, %c0_21], %56 {strides = array<i32>} : memref<1x1x256xf32, #tpu.memory_space<vmem>>, vector<1x1x256xf32>,
    return
  }
  func.func @transform_0(%arg0: i32) -> (i32, i32, i32) {
    %c0_i32 = arith.constant 0 : i32
    %c0_i32_0 = arith.constant 0 : i32
    %c0_i32_1 = arith.constant 0 : i32
    return %arg0, %c0_i32, %c0_i32_0 : i32, i32, i32
  }
  func.func @transform_1(%arg0: i32) -> (i32, i32, i32) {
    %c0_i32 = arith.constant 0 : i32
    %c0_i32_0 = arith.constant 0 : i32
    %c0_i32_1 = arith.constant 0 : i32
    return %arg0, %c0_i32, %c0_i32_0 : i32, i32, i32
  }
  func.func @transform_2(%arg0: i32) -> (i32, i32) {
    %c0_i32 = arith.constant 0 : i32
    %c0_i32_0 = arith.constant 0 : i32
    %c0_i32_1 = arith.constant 0 : i32
    return %c0_i32, %c0_i32_0 : i32, i32
  }
  func.func @transform_3(%arg0: i32) -> (i32, i32) {
    %c0_i32 = arith.constant 0 : i32
    %c0_i32_0 = arith.constant 0 : i32
    %c0_i32_1 = arith.constant 0 : i32
    return %c0_i32, %c0_i32_0 : i32, i32
  }
  func.func @transform_4(%arg0: i32) -> i32 {
    %c0_i32 = arith.constant 0 : i32
    %c0_i32_0 = arith.constant 0 : i32
    return %c0_i32 : i32
  }
  func.func @transform_5(%arg0: i32) -> (i32, i32, i32) {
    %c0_i32 = arith.constant 0 : i32
    %c0_i32_0 = arith.constant 0 : i32
    %c0_i32_1 = arith.constant 0 : i32
    return %arg0, %c0_i32, %c0_i32_0 : i32, i32, i32
  }
}

</mosaic_0001>

<llo_original>
// kernel: feed_forward_score.1
$region0: #{feed_forward_score.1}
  #allocation0 [shape = 'u32[]', space=smem, size = 0x4, offset = 0x4, fixed_abs, tag = 'smem constant byte address 0x4 - core index']
  #allocation1 [shape = 'u32[72,128]{1,0:T(1,128)}', space=vmem, size = 0x9000, scoped, tag = 'internal scratch']
  #allocation2 [shape = 'f32[1]{0:T(128)S(6)}', space=smem, size = 0x200, scoped, tag = 'scoped memory for feed_forward_score.1']
  %s0 = inlined_call_operand.hbm [shape: f32[64,8,128], index: 0, kind: input, shape index: {}]
  %s1 = inlined_call_operand.hbm [shape: f32[64,8,128], index: 1, kind: input, shape index: {}]
  %s2 = inlined_call_operand.vmem [shape: bf16[128,128], index: 2, kind: input, shape index: {}]
  %s3 = inlined_call_operand.vmem [shape: f32[4,128], index: 3, kind: input, shape index: {}]
  %s4 = inlined_call_operand.<no memory space> [shape: f32[1], index: 4, kind: input, shape index: {}]
  %s5 = inlined_call_operand.vmem [shape: f32[2,1,256], index: 5, kind: output, shape index: {}]
  %s6 = sld [smem:[#allocation0]]
  $region61: #{feed_forward_score.1} parent=0
    _
  %s8 = ssub.s32 1, %s6
  %s9 = scalar_select 0, %s8, %s6
  %10 = sst [smem:[#allocation2]] %s4
  $region1: #{feed_forward_score.1} parent=0
    #allocation3 [shape = 'u8[262144]{0}', space=vmem, size = 0x40000, scoped, tag = 'input window, operand 0']
    #allocation4 [shape = 's32[2]{0}', space=sflag, size = 0x8, scoped, tag = 'scoped memory for feed_forward_score.1']
    #allocation5 [shape = 'u8[262144]{0}', space=vmem, size = 0x40000, scoped, tag = 'input window, operand 1']
    #allocation6 [shape = 's32[2]{0}', space=sflag, size = 0x8, scoped, tag = 'scoped memory for feed_forward_score.1']
    %11 = vsyncpa [#allocation4], 0
    %s12 = scalar_lea.sflag [#allocation4], 1
    %13 = vsyncpa %s12, 0
    %14 = vsyncpa [#allocation6], 0
    %s15 = scalar_lea.sflag [#allocation6], 1
    %16 = vsyncpa %s15, 0
    loop: start=0, step=1, limit=4
    $region2: #{feed_forward_score.1} parent=1 // loop_pre_header
      _
    $region3: #{feed_forward_score.1} parent=1 // loop_header
      %s18 = sphi 0, %s22
      %p19 = scmp.ge.s32.totalorder %s18, 4
      %s28 = sphi 0, %s30
      %s31 = sphi 0, %s28
      %s32 = sphi 0, %s31
      %s48 = sphi 0, %s32
      %s54 = sphi 0, %s56
      %s57 = sphi 0, %s54
      %s58 = sphi 0, %s57
      %s74 = sphi 0, %s58
      %s78 = sphi 0, %s78
      %s80 = sphi 0, %s78
      %s81 = sphi 0, %s80
      %s95 = sphi 0, %s81
      %s99 = sphi 0, %s99
      %s101 = sphi 0, %s99
      %s102 = sphi 0, %s101
      %s116 = sphi 0, %s102
      %s120 = sphi 0, %s120
      %s122 = sphi 0, %s120
      %s123 = sphi 0, %s122
      %s137 = sphi 0, %s123
      %s143 = sphi 0, %s145
      %s146 = sphi 0, %s143
      %s147 = sphi 0, %s146
      %s163 = sphi 0, %s147
    $region4: #{feed_forward_score.1} parent=1 // loop_header_branch
      %21 = sbr.rel (%p19) target = $region8
    $region5: #{feed_forward_score.1} parent=1 // loop_body
      %s23 = ssub.s32 %s18, 1
      %s24 = ssub.s32 %s18, 2
      %s25 = sadd.s32 %s18, 1
      %s26 = ssub.s32 %s18, %s25
      %p27 = scmp.eq.s32.totalorder %s26, 0
      %s29 = sadd.s32 %s28, 1
      %s30 = scalar_select %p27, %s28, %s29
      %p33 = pneg %p27
      %p34 = scmp.eq.s32.totalorder %s18, 1
      %p35 = por %p33, %p34
      %p36 = scmp.ne.s32.totalorder %s28, %s31
      %p37 = scmp.eq.s32.totalorder %s18, 0
      %p38 = por %p36, %p37
      %p39 = scmp.ne.s32.totalorder %s28, %s31
      %p40 = scmp.eq.s32.totalorder %s23, 1
      %p41 = por %p39, %p40
      %p42 = scmp.ne.s32.totalorder %s31, %s32
      %p43 = scmp.eq.s32.totalorder %s23, 0
      %p44 = por %p42, %p43
      %p45 = scmp.ne.s32.totalorder %s31, %s32
      %p46 = scmp.eq.s32.totalorder %s24, 1
      %p47 = por %p45, %p46
      %p49 = scmp.ne.s32.totalorder %s32, %s48
      %p50 = scmp.eq.s32.totalorder %s24, 0
      %p51 = por %p49, %p50
      %s52 = ssub.s32 %s18, %s25
      %p53 = scmp.eq.s32.totalorder %s52, 0
      %s55 = sadd.s32 %s54, 1
      %s56 = scalar_select %p53, %s54, %s55
      %p59 = pneg %p53
      %p60 = scmp.eq.s32.totalorder %s18, 1
      %p61 = por %p59, %p60
      %p62 = scmp.ne.s32.totalorder %s54, %s57
      %p63 = scmp.eq.s32.totalorder %s18, 0
      %p64 = por %p62, %p63
      %p65 = scmp.ne.s32.totalorder %s54, %s57
      %p66 = scmp.eq.s32.totalorder %s23, 1
      %p67 = por %p65, %p66
      %p68 = scmp.ne.s32.totalorder %s57, %s58
      %p69 = scmp.eq.s32.totalorder %s23, 0
      %p70 = por %p68, %p69
      %p71 = scmp.ne.s32.totalorder %s57, %s58
      %p72 = scmp.eq.s32.totalorder %s24, 1
      %p73 = por %p71, %p72
      %p75 = scmp.ne.s32.totalorder %s58, %s74
      %p76 = scmp.eq.s32.totalorder %s24, 0
      %p77 = por %p75, %p76
      %s79 = sadd.s32 %s78, 1
      %p82 = scmp.eq.s32.totalorder %s18, 1
      %p83 = scmp.ne.s32.totalorder %s78, %s80
      %p84 = scmp.eq.s32.totalorder %s18, 0
      %p85 = por %p83, %p84
      %p86 = scmp.ne.s32.totalorder %s78, %s80
      %p87 = scmp.eq.s32.totalorder %s23, 1
      %p88 = por %p86, %p87
      %p89 = scmp.ne.s32.totalorder %s80, %s81
      %p90 = scmp.eq.s32.totalorder %s23, 0
      %p91 = por %p89, %p90
      %p92 = scmp.ne.s32.totalorder %s80, %s81
      %p93 = scmp.eq.s32.totalorder %s24, 1
      %p94 = por %p92, %p93
      %p96 = scmp.ne.s32.totalorder %s81, %s95
      %p97 = scmp.eq.s32.totalorder %s24, 0
      %p98 = por %p96, %p97
      %s100 = sadd.s32 %s99, 1
      %p103 = scmp.eq.s32.totalorder %s18, 1
      %p104 = scmp.ne.s32.totalorder %s99, %s101
      %p105 = scmp.eq.s32.totalorder %s18, 0
      %p106 = por %p104, %p105
      %p107 = scmp.ne.s32.totalorder %s99, %s101
      %p108 = scmp.eq.s32.totalorder %s23, 1
      %p109 = por %p107, %p108
      %p110 = scmp.ne.s32.totalorder %s101, %s102
      %p111 = scmp.eq.s32.totalorder %s23, 0
      %p112 = por %p110, %p111
      %p113 = scmp.ne.s32.totalorder %s101, %s102
      %p114 = scmp.eq.s32.totalorder %s24, 1
      %p115 = por %p113, %p114
      %p117 = scmp.ne.s32.totalorder %s102, %s116
      %p118 = scmp.eq.s32.totalorder %s24, 0
      %p119 = por %p117, %p118
      %s121 = sadd.s32 %s120, 1
      %p124 = scmp.eq.s32.totalorder %s18, 1
      %p125 = scmp.ne.s32.totalorder %s120, %s122
      %p126 = scmp.eq.s32.totalorder %s18, 0
      %p127 = por %p125, %p126
      %p128 = scmp.ne.s32.totalorder %s120, %s122
      %p129 = scmp.eq.s32.totalorder %s23, 1
      %p130 = por %p128, %p129
      %p131 = scmp.ne.s32.totalorder %s122, %s123
      %p132 = scmp.eq.s32.totalorder %s23, 0
      %p133 = por %p131, %p132
      %p134 = scmp.ne.s32.totalorder %s122, %s123
      %p135 = scmp.eq.s32.totalorder %s24, 1
      %p136 = por %p134, %p135
      %p138 = scmp.ne.s32.totalorder %s123, %s137
      %p139 = scmp.eq.s32.totalorder %s24, 0
      %p140 = por %p138, %p139
      %s141 = ssub.s32 %s18, %s25
      %p142 = scmp.eq.s32.totalorder %s141, 0
      %s144 = sadd.s32 %s143, 1
      %s145 = scalar_select %p142, %s143, %s144
      %p148 = pneg %p142
      %p149 = scmp.eq.s32.totalorder %s18, 1
      %p150 = por %p148, %p149
      %p151 = scmp.ne.s32.totalorder %s143, %s146
      %p152 = scmp.eq.s32.totalorder %s18, 0
      %p153 = por %p151, %p152
      %p154 = scmp.ne.s32.totalorder %s143, %s146
      %p155 = scmp.eq.s32.totalorder %s23, 1
      %p156 = por %p154, %p155
      %p157 = scmp.ne.s32.totalorder %s146, %s147
      %p158 = scmp.eq.s32.totalorder %s23, 0
      %p159 = por %p157, %p158
      %p160 = scmp.ne.s32.totalorder %s146, %s147
      %p161 = scmp.eq.s32.totalorder %s24, 1
      %p162 = por %p160, %p161
      %p164 = scmp.ne.s32.totalorder %s147, %s163
      %p165 = scmp.eq.s32.totalorder %s24, 0
      %p166 = por %p164, %p165
      %p167 = scmp.le.s32.totalorder 1, %s18
      %p168 = scmp.lt.s32.totalorder %s18, 3
      %p169 = pnand %p167, %p168
      %p170 = pneg %p169
      // Predicated region
      $region9: #{feed_forward_score.1} parent=5 // pred_check
        _
      $region10: #{feed_forward_score.1} parent=5 // pred_check_branch
        %172 = sbr.rel (%p169) target = $region12
      $region11: #{feed_forward_score.1} parent=5 // pred_region
        %s173 = ssub.s32 %s18, 1
        // Predicated region
        $region13: #{feed_forward_score.1} parent=11 // pred_check
          %p174 = pneg %p91
        $region14: #{feed_forward_score.1} parent=11 // pred_check_branch
          %176 = sbr.rel (%p174) target = $region16
        $region15: #{feed_forward_score.1} parent=11 // pred_region
          _
        $region16: #{feed_forward_score.1} parent=11 // pred_fallthru
          _
        // Predicated region
        $region17: #{feed_forward_score.1} parent=11 // pred_check
          %p177 = pneg %p112
        $region18: #{feed_forward_score.1} parent=11 // pred_check_branch
          %179 = sbr.rel (%p177) target = $region20
        $region19: #{feed_forward_score.1} parent=11 // pred_region
          _
        $region20: #{feed_forward_score.1} parent=11 // pred_fallthru
          _
        // Predicated region
        $region21: #{feed_forward_score.1} parent=11 // pred_check
          %p180 = pneg %p133
        $region22: #{feed_forward_score.1} parent=11 // pred_check_branch
          %182 = sbr.rel (%p180) target = $region24
        $region23: #{feed_forward_score.1} parent=11 // pred_region
          _
        $region24: #{feed_forward_score.1} parent=11 // pred_fallthru
          _
      $region12: #{feed_forward_score.1} parent=5 // pred_fallthru
        _
      %p183 = scmp.lt.s32.totalorder %s18, 2
      // Predicated region
      $region25: #{feed_forward_score.1} parent=5 // pred_check
        %p184 = pneg %p183
      $region26: #{feed_forward_score.1} parent=5 // pred_check_branch
        %186 = sbr.rel (%p184) target = $region28
      $region27: #{feed_forward_score.1} parent=5 // pred_region
        // Predicated region
        $region29: #{feed_forward_score.1} parent=27 // pred_check
          %p187 = pneg %p38
        $region30: #{feed_forward_score.1} parent=27 // pred_check_branch
          %189 = sbr.rel (%p187) target = $region32
        $region31: #{feed_forward_score.1} parent=27 // pred_region
          %s190 = sand.u32 %s28, 1
          %s191 = scalar_lea.sflag [#allocation4], %s190
          %s192 = sand.u32 %s28, 1
          %s193 = smul.addr %s192, 256
          %s194 = scalar_lea.vmem [#allocation3], %s193
          %s195 = smul.u32 32, %s18
          %197 = vsyncadd %s191, 0
          %s198 = smul.addr %s195, 8
          %s199 = scalar_lea.hbm %s0, %s198
          %s200 = sshll.u32 %s199, 4
          %s201 = int_to_ptr.hbm [resolvable:$true] %s200
          %s202 = sshll.u32 %s194, 4
          %s203 = int_to_ptr.vmem [resolvable:$true] %s202
          %208 = dma.hbm_to_vmem [thread:$0]  %s201, 4096, %s203, %s191, 128, 128, 8
        $region32: #{feed_forward_score.1} parent=27 // pred_fallthru
          _
        // Predicated region
        $region33: #{feed_forward_score.1} parent=27 // pred_check
          %p209 = pneg %p64
        $region34: #{feed_forward_score.1} parent=27 // pred_check_branch
          %211 = sbr.rel (%p209) target = $region36
        $region35: #{feed_forward_score.1} parent=27 // pred_region
          %s212 = sand.u32 %s54, 1
          %s213 = scalar_lea.sflag [#allocation6], %s212
          %s214 = sand.u32 %s54, 1
          %s215 = smul.addr %s214, 256
          %s216 = scalar_lea.vmem [#allocation5], %s215
          %s217 = smul.u32 32, %s18
          %219 = vsyncadd %s213, 0
          %s220 = smul.addr %s217, 8
          %s221 = scalar_lea.hbm %s1, %s220
          %s222 = sshll.u32 %s221, 4
          %s223 = int_to_ptr.hbm [resolvable:$true] %s222
          %s224 = sshll.u32 %s216, 4
          %s225 = int_to_ptr.vmem [resolvable:$true] %s224
          %230 = dma.hbm_to_vmem [thread:$0]  %s223, 4096, %s225, %s213, 128, 128, 8
        $region36: #{feed_forward_score.1} parent=27 // pred_fallthru
          _
      $region28: #{feed_forward_score.1} parent=5 // pred_fallthru
        _
      %p231 = scmp.le.s32.totalorder 1, %s18
      %p232 = scmp.lt.s32.totalorder %s18, 3
      %p233 = pnand %p231, %p232
      %p234 = pneg %p233
      // Predicated region
      $region37: #{feed_forward_score.1} parent=5 // pred_check
        _
      $region38: #{feed_forward_score.1} parent=5 // pred_check_branch
        %236 = sbr.rel (%p233) target = $region40
      $region39: #{feed_forward_score.1} parent=5 // pred_region
        %s237 = ssub.s32 %s18, 1
        %s238 = sand.u32 %s31, 1
        %s239 = scalar_lea.sflag [#allocation4], %s238
        %s240 = sand.u32 %s31, 1
        %s241 = smul.addr %s240, 256
        %s242 = scalar_lea.vmem [#allocation3], %s241
        // Predicated region
        $region41: #{feed_forward_score.1} parent=39 // pred_check
          %p243 = pneg %p44
        $region42: #{feed_forward_score.1} parent=39 // pred_check_branch
          %245 = sbr.rel (%p243) target = $region44
        $region43: #{feed_forward_score.1} parent=39 // pred_region
          %247 = dma.done %s239, 4096
        $region44: #{feed_forward_score.1} parent=39 // pred_fallthru
          _
        %s248 = sand.u32 %s57, 1
        %s249 = scalar_lea.sflag [#allocation6], %s248
        %s250 = sand.u32 %s57, 1
        %s251 = smul.addr %s250, 256
        %s252 = scalar_lea.vmem [#allocation5], %s251
        // Predicated region
        $region45: #{feed_forward_score.1} parent=39 // pred_check
          %p253 = pneg %p70
        $region46: #{feed_forward_score.1} parent=39 // pred_check_branch
          %255 = sbr.rel (%p253) target = $region48
        $region47: #{feed_forward_score.1} parent=39 // pred_region
          %257 = dma.done %s249, 4096
        $region48: #{feed_forward_score.1} parent=39 // pred_fallthru
          _
        %s258 = sand.u32 %s31, 1
        %s259 = scalar_lea.sflag [#allocation4], %s258
        %s260 = sand.u32 %s31, 1
        %s261 = smul.addr %s260, 256
        %s262 = scalar_lea.vmem [#allocation3], %s261
        %p263 = pneg %p44
        %p264 = pneg %p41
        %s265 = sand.u32 %s57, 1
        %s266 = scalar_lea.sflag [#allocation6], %s265
        %s267 = sand.u32 %s57, 1
        %s268 = smul.addr %s267, 256
        %s269 = scalar_lea.vmem [#allocation5], %s268
        %p270 = pneg %p70
        %p271 = pneg %p67
        %p272 = pneg %p91
        %p273 = pneg %p88
        %p274 = pneg %p112
        %p275 = pneg %p109
        %p276 = pneg %p133
        %p277 = pneg %p130
        %p278 = pneg %p159
        %p279 = pneg %p156
        %p280 = scmp.lt.s32.totalorder %s23, 1
        %s281 = scalar_select %p280, %s23, 1
        %s282 = smul.addr %s281, 2
        %s283 = scalar_lea.vmem %s5, %s282
        %s284 = smul.u32 32, %s23
        %s285 = smul.u32 32, %s23
        %p286 = scmp.lt.s32.totalorder %s23, 1
        %s287 = scalar_select %p286, %s23, 1
        %s288 = smul.addr %s287, 2
        %s289 = scalar_lea.vmem %s5, %s288
        %v290 = vld [vmem:[%s3] sm:$0xf]
        %v291 = vld [vmem:[%s242] sm:$0xff]
        %v292 = vld [vmem:[%s242 + $0x8] sm:$0xff]
        %v293 = vld [vmem:[%s242 + $0x10] sm:$0xff]
        %v294 = vld [vmem:[%s242 + $0x18] sm:$0xff]
        %v295 = vld [vmem:[%s242 + $0x20] sm:$0xff]
        %v296 = vld [vmem:[%s242 + $0x28] sm:$0xff]
        %v297 = vld [vmem:[%s242 + $0x30] sm:$0xff]
        %v298 = vld [vmem:[%s242 + $0x38] sm:$0xff]
        %v299 = vld [vmem:[%s242 + $0x40] sm:$0xff]
        %v300 = vld [vmem:[%s242 + $0x48] sm:$0xff]
        %v301 = vld [vmem:[%s242 + $0x50] sm:$0xff]
        %v302 = vld [vmem:[%s242 + $0x58] sm:$0xff]
        %v303 = vld [vmem:[%s242 + $0x60] sm:$0xff]
        %v304 = vld [vmem:[%s242 + $0x68] sm:$0xff]
        %v305 = vld [vmem:[%s242 + $0x70] sm:$0xff]
        %v306 = vld [vmem:[%s242 + $0x78] sm:$0xff]
        %v307 = vld [vmem:[%s242 + $0x80] sm:$0xff]
        %v308 = vld [vmem:[%s242 + $0x88] sm:$0xff]
        %v309 = vld [vmem:[%s242 + $0x90] sm:$0xff]
        %v310 = vld [vmem:[%s242 + $0x98] sm:$0xff]
        %v311 = vld [vmem:[%s242 + $0xa0] sm:$0xff]
        %v312 = vld [vmem:[%s242 + $0xa8] sm:$0xff]
        %v313 = vld [vmem:[%s242 + $0xb0] sm:$0xff]
        %v314 = vld [vmem:[%s242 + $0xb8] sm:$0xff]
        %v315 = vld [vmem:[%s242 + $0xc0] sm:$0xff]
        %v316 = vld [vmem:[%s242 + $0xc8] sm:$0xff]
        %v317 = vld [vmem:[%s242 + $0xd0] sm:$0xff]
        %v318 = vld [vmem:[%s242 + $0xd8] sm:$0xff]
        %v319 = vld [vmem:[%s242 + $0xe0] sm:$0xff]
        %v320 = vld [vmem:[%s242 + $0xe8] sm:$0xff]
        %v321 = vld [vmem:[%s242 + $0xf0] sm:$0xff]
        %v322 = vld [vmem:[%s242 + $0xf8] sm:$0xff]
        %v323 = vpack.c.bf16 %v292, %v291
        %v324 = vpack.c.bf16 %v294, %v293
        %v325 = vpack.c.bf16 %v296, %v295
        %v326 = vpack.c.bf16 %v298, %v297
        %v327 = vpack.c.bf16 %v300, %v299
        %v328 = vpack.c.bf16 %v302, %v301
        %v329 = vpack.c.bf16 %v304, %v303
        %v330 = vpack.c.bf16 %v306, %v305
        %v331 = vpack.c.bf16 %v308, %v307
        %v332 = vpack.c.bf16 %v310, %v309
        %v333 = vpack.c.bf16 %v312, %v311
        %v334 = vpack.c.bf16 %v314, %v313
        %v335 = vpack.c.bf16 %v316, %v315
        %v336 = vpack.c.bf16 %v318, %v317
        %v337 = vpack.c.bf16 %v320, %v319
        %v338 = vpack.c.bf16 %v322, %v321
        %v339 = vld [vmem:[%s2] sm:$0xf]
        %v340 = vld [vmem:[%s2 + $0x4] sm:$0xf]
        %v341 = vld [vmem:[%s2 + $0x8] sm:$0xf]
        %v342 = vld [vmem:[%s2 + $0xc] sm:$0xf]
        %v343 = vld [vmem:[%s2 + $0x10] sm:$0xf]
        %v344 = vld [vmem:[%s2 + $0x14] sm:$0xf]
        %v345 = vld [vmem:[%s2 + $0x18] sm:$0xf]
        %v346 = vld [vmem:[%s2 + $0x1c] sm:$0xf]
        %v347 = vld [vmem:[%s2 + $0x20] sm:$0xf]
        %v348 = vld [vmem:[%s2 + $0x24] sm:$0xf]
        %v349 = vld [vmem:[%s2 + $0x28] sm:$0xf]
        %v350 = vld [vmem:[%s2 + $0x2c] sm:$0xf]
        %v351 = vld [vmem:[%s2 + $0x30] sm:$0xf]
        %v352 = vld [vmem:[%s2 + $0x34] sm:$0xf]
        %v353 = vld [vmem:[%s2 + $0x38] sm:$0xf]
        %v354 = vld [vmem:[%s2 + $0x3c] sm:$0xf]
        %v355 = vperm.slane %v290, 0
        %v372 = vunpack.c.l.b16 %v339
        %v373 = vunpack.c.l.b16 %v340
        %v374 = vunpack.c.l.b16 %v341
        %v375 = vunpack.c.l.b16 %v342
        %v376 = vunpack.c.l.b16 %v343
        %v377 = vunpack.c.l.b16 %v344
        %v378 = vunpack.c.l.b16 %v345
        %v379 = vunpack.c.l.b16 %v346
        %v380 = vunpack.c.l.b16 %v347
        %v381 = vunpack.c.l.b16 %v348
        %v382 = vunpack.c.l.b16 %v349
        %v383 = vunpack.c.l.b16 %v350
        %v384 = vunpack.c.l.b16 %v351
        %v385 = vunpack.c.l.b16 %v352
        %v386 = vunpack.c.l.b16 %v353
        %v387 = vunpack.c.l.b16 %v354
        %v388 = vpack.c.b16 %v373, %v372
        %v389 = vpack.c.b16 %v375, %v374
        %v390 = vpack.c.b16 %v377, %v376
        %v391 = vpack.c.b16 %v379, %v378
        %v392 = vpack.c.b16 %v381, %v380
        %v393 = vpack.c.b16 %v383, %v382
        %v394 = vpack.c.b16 %v385, %v384
        %v395 = vpack.c.b16 %v387, %v386
        %404 = vmatpush.bf16.msra.mxu0 %v395
        %405 = vmatpush.bf16.msra.mxu0 %v394
        %406 = vmatpush.bf16.msra.mxu0 %v393
        %407 = vmatpush.bf16.msra.mxu0 %v392
        %408 = vmatpush.bf16.msra.mxu0 %v391
        %409 = vmatpush.bf16.msra.mxu0 %v390
        %410 = vmatpush.bf16.msra.mxu0 %v389
        %411 = vmatpush.bf16.msra.mxu0 %v388
        %412 = vmatmul.bf16.gmra.mxu0 %v323
        %v413 = vpop.f32.mrf.mxu0
        %v414 = vadd.f32 %v355, %v413
        %v415 = vpop.f32.mrf.mxu0
        %v416 = vadd.f32 %v355, %v415
        %417 = vmatmul.bf16.gmra.mxu0 %v324
        %v418 = vpop.f32.mrf.mxu0
        %v419 = vadd.f32 %v355, %v418
        %v420 = vpop.f32.mrf.mxu0
        %v421 = vadd.f32 %v355, %v420
        %422 = vmatmul.bf16.gmra.mxu0 %v325
        %v423 = vpop.f32.mrf.mxu0
        %v424 = vadd.f32 %v355, %v423
        %v425 = vpop.f32.mrf.mxu0
        %v426 = vadd.f32 %v355, %v425
        %427 = vmatmul.bf16.gmra.mxu0 %v326
        %v428 = vpop.f32.mrf.mxu0
        %v429 = vadd.f32 %v355, %v428
        %v430 = vpop.f32.mrf.mxu0
        %v431 = vadd.f32 %v355, %v430
        %432 = vmatmul.bf16.gmra.mxu0 %v327
        %v433 = vpop.f32.mrf.mxu0
        %v434 = vadd.f32 %v355, %v433
        %v435 = vpop.f32.mrf.mxu0
        %v436 = vadd.f32 %v355, %v435
        %437 = vmatmul.bf16.gmra.mxu0 %v328
        %v438 = vpop.f32.mrf.mxu0
        %v439 = vadd.f32 %v355, %v438
        %v440 = vpop.f32.mrf.mxu0
        %v441 = vadd.f32 %v355, %v440
        %442 = vmatmul.bf16.gmra.mxu0 %v329
        %v443 = vpop.f32.mrf.mxu0
        %v444 = vadd.f32 %v355, %v443
        %v445 = vpop.f32.mrf.mxu0
        %v446 = vadd.f32 %v355, %v445
        %447 = vmatmul.bf16.gmra.mxu0 %v330
        %v448 = vpop.f32.mrf.mxu0
        %v449 = vadd.f32 %v355, %v448
        %v450 = vpop.f32.mrf.mxu0
        %v451 = vadd.f32 %v355, %v450
        %452 = vmatmul.bf16.gmra.mxu0 %v331
        %v453 = vpop.f32.mrf.mxu0
        %v454 = vadd.f32 %v355, %v453
        %v455 = vpop.f32.mrf.mxu0
        %v456 = vadd.f32 %v355, %v455
        %457 = vmatmul.bf16.gmra.mxu0 %v332
        %v458 = vpop.f32.mrf.mxu0
        %v459 = vadd.f32 %v355, %v458
        %v460 = vpop.f32.mrf.mxu0
        %v461 = vadd.f32 %v355, %v460
        %462 = vmatmul.bf16.gmra.mxu0 %v333
        %v463 = vpop.f32.mrf.mxu0
        %v464 = vadd.f32 %v355, %v463
        %v465 = vpop.f32.mrf.mxu0
        %v466 = vadd.f32 %v355, %v465
        %467 = vmatmul.bf16.gmra.mxu0 %v334
        %v468 = vpop.f32.mrf.mxu0
        %v469 = vadd.f32 %v355, %v468
        %v470 = vpop.f32.mrf.mxu0
        %v471 = vadd.f32 %v355, %v470
        %472 = vmatmul.bf16.gmra.mxu0 %v335
        %v473 = vpop.f32.mrf.mxu0
        %v474 = vadd.f32 %v355, %v473
        %v475 = vpop.f32.mrf.mxu0
        %v476 = vadd.f32 %v355, %v475
        %477 = vmatmul.bf16.gmra.mxu0 %v336
        %v478 = vpop.f32.mrf.mxu0
        %v479 = vadd.f32 %v355, %v478
        %v480 = vpop.f32.mrf.mxu0
        %v481 = vadd.f32 %v355, %v480
        %482 = vmatmul.bf16.gmra.mxu0 %v337
        %v483 = vpop.f32.mrf.mxu0
        %v484 = vadd.f32 %v355, %v483
        %v485 = vpop.f32.mrf.mxu0
        %v486 = vadd.f32 %v355, %v485
        %487 = vmatmul.bf16.gmra.mxu0 %v338
        %v488 = vpop.f32.mrf.mxu0
        %v489 = vadd.f32 %v355, %v488
        %v490 = vpop.f32.mrf.mxu0
        %v491 = vadd.f32 %v355, %v490
        %492 = vdwg.mxu0
        %v493 = vmul.f32 %v414, 0.01
        %v494 = vmul.f32 %v416, 0.01
        %v495 = vmul.f32 %v419, 0.01
        %v496 = vmul.f32 %v421, 0.01
        %v497 = vmul.f32 %v424, 0.01
        %v498 = vmul.f32 %v426, 0.01
        %v499 = vmul.f32 %v429, 0.01
        %v500 = vmul.f32 %v431, 0.01
        %v501 = vmul.f32 %v434, 0.01
        %v502 = vmul.f32 %v436, 0.01
        %v503 = vmul.f32 %v439, 0.01
        %v504 = vmul.f32 %v441, 0.01
        %v505 = vmul.f32 %v444, 0.01
        %v506 = vmul.f32 %v446, 0.01
        %v507 = vmul.f32 %v449, 0.01
        %v508 = vmul.f32 %v451, 0.01
        %v509 = vmul.f32 %v454, 0.01
        %v510 = vmul.f32 %v456, 0.01
        %v511 = vmul.f32 %v459, 0.01
        %v512 = vmul.f32 %v461, 0.01
        %v513 = vmul.f32 %v464, 0.01
        %v514 = vmul.f32 %v466, 0.01
        %v515 = vmul.f32 %v469, 0.01
        %v516 = vmul.f32 %v471, 0.01
        %v517 = vmul.f32 %v474, 0.01
        %v518 = vmul.f32 %v476, 0.01
        %v519 = vmul.f32 %v479, 0.01
        %v520 = vmul.f32 %v481, 0.01
        %v521 = vmul.f32 %v484, 0.01
        %v522 = vmul.f32 %v486, 0.01
        %v523 = vmul.f32 %v489, 0.01
        %v524 = vmul.f32 %v491, 0.01
        %v525 = vmax.f32 %v414, %v493
        %v526 = vmax.f32 %v416, %v494
        %v527 = vmax.f32 %v419, %v495
        %v528 = vmax.f32 %v421, %v496
        %v529 = vmax.f32 %v424, %v497
        %v530 = vmax.f32 %v426, %v498
        %v531 = vmax.f32 %v429, %v499
        %v532 = vmax.f32 %v431, %v500
        %v533 = vmax.f32 %v434, %v501
        %v534 = vmax.f32 %v436, %v502
        %v535 = vmax.f32 %v439, %v503
        %v536 = vmax.f32 %v441, %v504
        %v537 = vmax.f32 %v444, %v505
        %v538 = vmax.f32 %v446, %v506
        %v539 = vmax.f32 %v449, %v507
        %v540 = vmax.f32 %v451, %v508
        %v541 = vmax.f32 %v454, %v509
        %v542 = vmax.f32 %v456, %v510
        %v543 = vmax.f32 %v459, %v511
        %v544 = vmax.f32 %v461, %v512
        %v545 = vmax.f32 %v464, %v513
        %v546 = vmax.f32 %v466, %v514
        %v547 = vmax.f32 %v469, %v515
        %v548 = vmax.f32 %v471, %v516
        %v549 = vmax.f32 %v474, %v517
        %v550 = vmax.f32 %v476, %v518
        %v551 = vmax.f32 %v479, %v519
        %v552 = vmax.f32 %v481, %v520
        %v553 = vmax.f32 %v484, %v521
        %v554 = vmax.f32 %v486, %v522
        %v555 = vmax.f32 %v489, %v523
        %v556 = vmax.f32 %v491, %v524
        %v557 = vrot.slane %v525, 4
        %v558 = vadd.f32 %v525, %v557
        %v559 = vrot.slane %v558, 2
        %v560 = vadd.f32 %v558, %v559
        %v561 = vrot.slane %v560, 1
        %v562 = vadd.f32 %v560, %v561
        %v563 = vrot.slane %v526, 4
        %v564 = vadd.f32 %v526, %v563
        %v565 = vrot.slane %v564, 2
        %v566 = vadd.f32 %v564, %v565
        %v567 = vrot.slane %v566, 1
        %v568 = vadd.f32 %v566, %v567
        %v569 = vrot.slane %v527, 4
        %v570 = vadd.f32 %v527, %v569
        %v571 = vrot.slane %v570, 2
        %v572 = vadd.f32 %v570, %v571
        %v573 = vrot.slane %v572, 1
        %v574 = vadd.f32 %v572, %v573
        %v575 = vrot.slane %v528, 4
        %v576 = vadd.f32 %v528, %v575
        %v577 = vrot.slane %v576, 2
        %v578 = vadd.f32 %v576, %v577
        %v579 = vrot.slane %v578, 1
        %v580 = vadd.f32 %v578, %v579
        %v581 = vrot.slane %v529, 4
        %v582 = vadd.f32 %v529, %v581
        %v583 = vrot.slane %v582, 2
        %v584 = vadd.f32 %v582, %v583
        %v585 = vrot.slane %v584, 1
        %v586 = vadd.f32 %v584, %v585
        %v587 = vrot.slane %v530, 4
        %v588 = vadd.f32 %v530, %v587
        %v589 = vrot.slane %v588, 2
        %v590 = vadd.f32 %v588, %v589
        %v591 = vrot.slane %v590, 1
        %v592 = vadd.f32 %v590, %v591
        %v593 = vrot.slane %v531, 4
        %v594 = vadd.f32 %v531, %v593
        %v595 = vrot.slane %v594, 2
        %v596 = vadd.f32 %v594, %v595
        %v597 = vrot.slane %v596, 1
        %v598 = vadd.f32 %v596, %v597
        %v599 = vrot.slane %v532, 4
        %v600 = vadd.f32 %v532, %v599
        %v601 = vrot.slane %v600, 2
        %v602 = vadd.f32 %v600, %v601
        %v603 = vrot.slane %v602, 1
        %v604 = vadd.f32 %v602, %v603
        %v605 = vrot.slane %v533, 4
        %v606 = vadd.f32 %v533, %v605
        %v607 = vrot.slane %v606, 2
        %v608 = vadd.f32 %v606, %v607
        %v609 = vrot.slane %v608, 1
        %v610 = vadd.f32 %v608, %v609
        %v611 = vrot.slane %v534, 4
        %v612 = vadd.f32 %v534, %v611
        %v613 = vrot.slane %v612, 2
        %v614 = vadd.f32 %v612, %v613
        %v615 = vrot.slane %v614, 1
        %v616 = vadd.f32 %v614, %v615
        %v617 = vrot.slane %v535, 4
        %v618 = vadd.f32 %v535, %v617
        %v619 = vrot.slane %v618, 2
        %v620 = vadd.f32 %v618, %v619
        %v621 = vrot.slane %v620, 1
        %v622 = vadd.f32 %v620, %v621
        %v623 = vrot.slane %v536, 4
        %v624 = vadd.f32 %v536, %v623
        %v625 = vrot.slane %v624, 2
        %v626 = vadd.f32 %v624, %v625
        %v627 = vrot.slane %v626, 1
        %v628 = vadd.f32 %v626, %v627
        %v629 = vrot.slane %v537, 4
        %v630 = vadd.f32 %v537, %v629
        %v631 = vrot.slane %v630, 2
        %v632 = vadd.f32 %v630, %v631
        %v633 = vrot.slane %v632, 1
        %v634 = vadd.f32 %v632, %v633
        %v635 = vrot.slane %v538, 4
        %v636 = vadd.f32 %v538, %v635
        %v637 = vrot.slane %v636, 2
        %v638 = vadd.f32 %v636, %v637
        %v639 = vrot.slane %v638, 1
        %v640 = vadd.f32 %v638, %v639
        %v641 = vrot.slane %v539, 4
        %v642 = vadd.f32 %v539, %v641
        %v643 = vrot.slane %v642, 2
        %v644 = vadd.f32 %v642, %v643
        %v645 = vrot.slane %v644, 1
        %v646 = vadd.f32 %v644, %v645
        %v647 = vrot.slane %v540, 4
        %v648 = vadd.f32 %v540, %v647
        %v649 = vrot.slane %v648, 2
        %v650 = vadd.f32 %v648, %v649
        %v651 = vrot.slane %v650, 1
        %v652 = vadd.f32 %v650, %v651
        %v653 = vrot.slane %v541, 4
        %v654 = vadd.f32 %v541, %v653
        %v655 = vrot.slane %v654, 2
        %v656 = vadd.f32 %v654, %v655
        %v657 = vrot.slane %v656, 1
        %v658 = vadd.f32 %v656, %v657
        %v659 = vrot.slane %v542, 4
        %v660 = vadd.f32 %v542, %v659
        %v661 = vrot.slane %v660, 2
        %v662 = vadd.f32 %v660, %v661
        %v663 = vrot.slane %v662, 1
        %v664 = vadd.f32 %v662, %v663
        %v665 = vrot.slane %v543, 4
        %v666 = vadd.f32 %v543, %v665
        %v667 = vrot.slane %v666, 2
        %v668 = vadd.f32 %v666, %v667
        %v669 = vrot.slane %v668, 1
        %v670 = vadd.f32 %v668, %v669
        %v671 = vrot.slane %v544, 4
        %v672 = vadd.f32 %v544, %v671
        %v673 = vrot.slane %v672, 2
        %v674 = vadd.f32 %v672, %v673
        %v675 = vrot.slane %v674, 1
        %v676 = vadd.f32 %v674, %v675
        %v677 = vrot.slane %v545, 4
        %v678 = vadd.f32 %v545, %v677
        %v679 = vrot.slane %v678, 2
        %v680 = vadd.f32 %v678, %v679
        %v681 = vrot.slane %v680, 1
        %v682 = vadd.f32 %v680, %v681
        %v683 = vrot.slane %v546, 4
        %v684 = vadd.f32 %v546, %v683
        %v685 = vrot.slane %v684, 2
        %v686 = vadd.f32 %v684, %v685
        %v687 = vrot.slane %v686, 1
        %v688 = vadd.f32 %v686, %v687
        %v689 = vrot.slane %v547, 4
        %v690 = vadd.f32 %v547, %v689
        %v691 = vrot.slane %v690, 2
        %v692 = vadd.f32 %v690, %v691
        %v693 = vrot.slane %v692, 1
        %v694 = vadd.f32 %v692, %v693
        %v695 = vrot.slane %v548, 4
        %v696 = vadd.f32 %v548, %v695
        %v697 = vrot.slane %v696, 2
        %v698 = vadd.f32 %v696, %v697
        %v699 = vrot.slane %v698, 1
        %v700 = vadd.f32 %v698, %v699
        %v701 = vrot.slane %v549, 4
        %v702 = vadd.f32 %v549, %v701
        %v703 = vrot.slane %v702, 2
        %v704 = vadd.f32 %v702, %v703
        %v705 = vrot.slane %v704, 1
        %v706 = vadd.f32 %v704, %v705
        %v707 = vrot.slane %v550, 4
        %v708 = vadd.f32 %v550, %v707
        %v709 = vrot.slane %v708, 2
        %v710 = vadd.f32 %v708, %v709
        %v711 = vrot.slane %v710, 1
        %v712 = vadd.f32 %v710, %v711
        %v713 = vrot.slane %v551, 4
        %v714 = vadd.f32 %v551, %v713
        %v715 = vrot.slane %v714, 2
        %v716 = vadd.f32 %v714, %v715
        %v717 = vrot.slane %v716, 1
        %v718 = vadd.f32 %v716, %v717
        %v719 = vrot.slane %v552, 4
        %v720 = vadd.f32 %v552, %v719
        %v721 = vrot.slane %v720, 2
        %v722 = vadd.f32 %v720, %v721
        %v723 = vrot.slane %v722, 1
        %v724 = vadd.f32 %v722, %v723
        %v725 = vrot.slane %v553, 4
        %v726 = vadd.f32 %v553, %v725
        %v727 = vrot.slane %v726, 2
        %v728 = vadd.f32 %v726, %v727
        %v729 = vrot.slane %v728, 1
        %v730 = vadd.f32 %v728, %v729
        %v731 = vrot.slane %v554, 4
        %v732 = vadd.f32 %v554, %v731
        %v733 = vrot.slane %v732, 2
        %v734 = vadd.f32 %v732, %v733
        %v735 = vrot.slane %v734, 1
        %v736 = vadd.f32 %v734, %v735
        %v737 = vrot.slane %v555, 4
        %v738 = vadd.f32 %v555, %v737
        %v739 = vrot.slane %v738, 2
        %v740 = vadd.f32 %v738, %v739
        %v741 = vrot.slane %v740, 1
        %v742 = vadd.f32 %v740, %v741
        %v743 = vrot.slane %v556, 4
        %v744 = vadd.f32 %v556, %v743
        %v745 = vrot.slane %v744, 2
        %v746 = vadd.f32 %v744, %v745
        %v747 = vrot.slane %v746, 1
        %v748 = vadd.f32 %v746, %v747
        %v749 = vmul.f32 %v562, 0.125
        %v750 = vmul.f32 %v568, 0.125
        %v751 = vmul.f32 %v574, 0.125
        %v752 = vmul.f32 %v580, 0.125
        %v753 = vmul.f32 %v586, 0.125
        %v754 = vmul.f32 %v592, 0.125
        %v755 = vmul.f32 %v598, 0.125
        %v756 = vmul.f32 %v604, 0.125
        %v757 = vmul.f32 %v610, 0.125
        %v758 = vmul.f32 %v616, 0.125
        %v759 = vmul.f32 %v622, 0.125
        %v760 = vmul.f32 %v628, 0.125
        %v761 = vmul.f32 %v634, 0.125
        %v762 = vmul.f32 %v640, 0.125
        %v763 = vmul.f32 %v646, 0.125
        %v764 = vmul.f32 %v652, 0.125
        %v765 = vmul.f32 %v658, 0.125
        %v766 = vmul.f32 %v664, 0.125
        %v767 = vmul.f32 %v670, 0.125
        %v768 = vmul.f32 %v676, 0.125
        %v769 = vmul.f32 %v682, 0.125
        %v770 = vmul.f32 %v688, 0.125
        %v771 = vmul.f32 %v694, 0.125
        %v772 = vmul.f32 %v700, 0.125
        %v773 = vmul.f32 %v706, 0.125
        %v774 = vmul.f32 %v712, 0.125
        %v775 = vmul.f32 %v718, 0.125
        %v776 = vmul.f32 %v724, 0.125
        %v777 = vmul.f32 %v730, 0.125
        %v778 = vmul.f32 %v736, 0.125
        %v779 = vmul.f32 %v742, 0.125
        %v780 = vmul.f32 %v748, 0.125
        %v781 = vsub.f32 %v525, %v749
        %v782 = vsub.f32 %v526, %v750
        %v783 = vsub.f32 %v527, %v751
        %v784 = vsub.f32 %v528, %v752
        %v785 = vsub.f32 %v529, %v753
        %v786 = vsub.f32 %v530, %v754
        %v787 = vsub.f32 %v531, %v755
        %v788 = vsub.f32 %v532, %v756
        %v789 = vsub.f32 %v533, %v757
        %v790 = vsub.f32 %v534, %v758
        %v791 = vsub.f32 %v535, %v759
        %v792 = vsub.f32 %v536, %v760
        %v793 = vsub.f32 %v537, %v761
        %v794 = vsub.f32 %v538, %v762
        %v795 = vsub.f32 %v539, %v763
        %v796 = vsub.f32 %v540, %v764
        %v797 = vsub.f32 %v541, %v765
        %v798 = vsub.f32 %v542, %v766
        %v799 = vsub.f32 %v543, %v767
        %v800 = vsub.f32 %v544, %v768
        %v801 = vsub.f32 %v545, %v769
        %v802 = vsub.f32 %v546, %v770
        %v803 = vsub.f32 %v547, %v771
        %v804 = vsub.f32 %v548, %v772
        %v805 = vsub.f32 %v549, %v773
        %v806 = vsub.f32 %v550, %v774
        %v807 = vsub.f32 %v551, %v775
        %v808 = vsub.f32 %v552, %v776
        %v809 = vsub.f32 %v553, %v777
        %v810 = vsub.f32 %v554, %v778
        %v811 = vsub.f32 %v555, %v779
        %v812 = vsub.f32 %v556, %v780
        %v813 = vmul.f32 %v781, %v781
        %v814 = vmul.f32 %v782, %v782
        %v815 = vmul.f32 %v783, %v783
        %v816 = vmul.f32 %v784, %v784
        %v817 = vmul.f32 %v785, %v785
        %v818 = vmul.f32 %v786, %v786
        %v819 = vmul.f32 %v787, %v787
        %v820 = vmul.f32 %v788, %v788
        %v821 = vmul.f32 %v789, %v789
        %v822 = vmul.f32 %v790, %v790
        %v823 = vmul.f32 %v791, %v791
        %v824 = vmul.f32 %v792, %v792
        %v825 = vmul.f32 %v793, %v793
        %v826 = vmul.f32 %v794, %v794
        %v827 = vmul.f32 %v795, %v795
        %v828 = vmul.f32 %v796, %v796
        %v829 = vmul.f32 %v797, %v797
        %v830 = vmul.f32 %v798, %v798
        %v831 = vmul.f32 %v799, %v799
        %v832 = vmul.f32 %v800, %v800
        %v833 = vmul.f32 %v801, %v801
        %v834 = vmul.f32 %v802, %v802
        %v835 = vmul.f32 %v803, %v803
        %v836 = vmul.f32 %v804, %v804
        %v837 = vmul.f32 %v805, %v805
        %v838 = vmul.f32 %v806, %v806
        %v839 = vmul.f32 %v807, %v807
        %v840 = vmul.f32 %v808, %v808
        %v841 = vmul.f32 %v809, %v809
        %v842 = vmul.f32 %v810, %v810
        %v843 = vmul.f32 %v811, %v811
        %v844 = vmul.f32 %v812, %v812
        %v845 = vrot.slane %v813, 4
        %v846 = vadd.f32 %v813, %v845
        %v847 = vrot.slane %v846, 2
        %v848 = vadd.f32 %v846, %v847
        %v849 = vrot.slane %v848, 1
        %v850 = vadd.f32 %v848, %v849
        %v851 = vrot.slane %v814, 4
        %v852 = vadd.f32 %v814, %v851
        %v853 = vrot.slane %v852, 2
        %v854 = vadd.f32 %v852, %v853
        %v855 = vrot.slane %v854, 1
        %v856 = vadd.f32 %v854, %v855
        %v857 = vrot.slane %v815, 4
        %v858 = vadd.f32 %v815, %v857
        %v859 = vrot.slane %v858, 2
        %v860 = vadd.f32 %v858, %v859
        %v861 = vrot.slane %v860, 1
        %v862 = vadd.f32 %v860, %v861
        %v863 = vrot.slane %v816, 4
        %v864 = vadd.f32 %v816, %v863
        %v865 = vrot.slane %v864, 2
        %v866 = vadd.f32 %v864, %v865
        %v867 = vrot.slane %v866, 1
        %v868 = vadd.f32 %v866, %v867
        %v869 = vrot.slane %v817, 4
        %v870 = vadd.f32 %v817, %v869
        %v871 = vrot.slane %v870, 2
        %v872 = vadd.f32 %v870, %v871
        %v873 = vrot.slane %v872, 1
        %v874 = vadd.f32 %v872, %v873
        %v875 = vrot.slane %v818, 4
        %v876 = vadd.f32 %v818, %v875
        %v877 = vrot.slane %v876, 2
        %v878 = vadd.f32 %v876, %v877
        %v879 = vrot.slane %v878, 1
        %v880 = vadd.f32 %v878, %v879
        %v881 = vrot.slane %v819, 4
        %v882 = vadd.f32 %v819, %v881
        %v883 = vrot.slane %v882, 2
        %v884 = vadd.f32 %v882, %v883
        %v885 = vrot.slane %v884, 1
        %v886 = vadd.f32 %v884, %v885
        %v887 = vrot.slane %v820, 4
        %v888 = vadd.f32 %v820, %v887
        %v889 = vrot.slane %v888, 2
        %v890 = vadd.f32 %v888, %v889
        %v891 = vrot.slane %v890, 1
        %v892 = vadd.f32 %v890, %v891
        %v893 = vrot.slane %v821, 4
        %v894 = vadd.f32 %v821, %v893
        %v895 = vrot.slane %v894, 2
        %v896 = vadd.f32 %v894, %v895
        %v897 = vrot.slane %v896, 1
        %v898 = vadd.f32 %v896, %v897
        %v899 = vrot.slane %v822, 4
        %v900 = vadd.f32 %v822, %v899
        %v901 = vrot.slane %v900, 2
        %v902 = vadd.f32 %v900, %v901
        %v903 = vrot.slane %v902, 1
        %v904 = vadd.f32 %v902, %v903
        %v905 = vrot.slane %v823, 4
        %v906 = vadd.f32 %v823, %v905
        %v907 = vrot.slane %v906, 2
        %v908 = vadd.f32 %v906, %v907
        %v909 = vrot.slane %v908, 1
        %v910 = vadd.f32 %v908, %v909
        %v911 = vrot.slane %v824, 4
        %v912 = vadd.f32 %v824, %v911
        %v913 = vrot.slane %v912, 2
        %v914 = vadd.f32 %v912, %v913
        %v915 = vrot.slane %v914, 1
        %v916 = vadd.f32 %v914, %v915
        %v917 = vrot.slane %v825, 4
        %v918 = vadd.f32 %v825, %v917
        %v919 = vrot.slane %v918, 2
        %v920 = vadd.f32 %v918, %v919
        %v921 = vrot.slane %v920, 1
        %v922 = vadd.f32 %v920, %v921
        %v923 = vrot.slane %v826, 4
        %v924 = vadd.f32 %v826, %v923
        %v925 = vrot.slane %v924, 2
        %v926 = vadd.f32 %v924, %v925
        %v927 = vrot.slane %v926, 1
        %v928 = vadd.f32 %v926, %v927
        %v929 = vrot.slane %v827, 4
        %v930 = vadd.f32 %v827, %v929
        %v931 = vrot.slane %v930, 2
        %v932 = vadd.f32 %v930, %v931
        %v933 = vrot.slane %v932, 1
        %v934 = vadd.f32 %v932, %v933
        %v935 = vrot.slane %v828, 4
        %v936 = vadd.f32 %v828, %v935
        %v937 = vrot.slane %v936, 2
        %v938 = vadd.f32 %v936, %v937
        %v939 = vrot.slane %v938, 1
        %v940 = vadd.f32 %v938, %v939
        %v941 = vrot.slane %v829, 4
        %v942 = vadd.f32 %v829, %v941
        %v943 = vrot.slane %v942, 2
        %v944 = vadd.f32 %v942, %v943
        %v945 = vrot.slane %v944, 1
        %v946 = vadd.f32 %v944, %v945
        %v947 = vrot.slane %v830, 4
        %v948 = vadd.f32 %v830, %v947
        %v949 = vrot.slane %v948, 2
        %v950 = vadd.f32 %v948, %v949
        %v951 = vrot.slane %v950, 1
        %v952 = vadd.f32 %v950, %v951
        %v953 = vrot.slane %v831, 4
        %v954 = vadd.f32 %v831, %v953
        %v955 = vrot.slane %v954, 2
        %v956 = vadd.f32 %v954, %v955
        %v957 = vrot.slane %v956, 1
        %v958 = vadd.f32 %v956, %v957
        %v959 = vrot.slane %v832, 4
        %v960 = vadd.f32 %v832, %v959
        %v961 = vrot.slane %v960, 2
        %v962 = vadd.f32 %v960, %v961
        %v963 = vrot.slane %v962, 1
        %v964 = vadd.f32 %v962, %v963
        %v965 = vrot.slane %v833, 4
        %v966 = vadd.f32 %v833, %v965
        %v967 = vrot.slane %v966, 2
        %v968 = vadd.f32 %v966, %v967
        %v969 = vrot.slane %v968, 1
        %v970 = vadd.f32 %v968, %v969
        %v971 = vrot.slane %v834, 4
        %v972 = vadd.f32 %v834, %v971
        %v973 = vrot.slane %v972, 2
        %v974 = vadd.f32 %v972, %v973
        %v975 = vrot.slane %v974, 1
        %v976 = vadd.f32 %v974, %v975
        %v977 = vrot.slane %v835, 4
        %v978 = vadd.f32 %v835, %v977
        %v979 = vrot.slane %v978, 2
        %v980 = vadd.f32 %v978, %v979
        %v981 = vrot.slane %v980, 1
        %v982 = vadd.f32 %v980, %v981
        %v983 = vrot.slane %v836, 4
        %v984 = vadd.f32 %v836, %v983
        %v985 = vrot.slane %v984, 2
        %v986 = vadd.f32 %v984, %v985
        %v987 = vrot.slane %v986, 1
        %v988 = vadd.f32 %v986, %v987
        %v989 = vrot.slane %v837, 4
        %v990 = vadd.f32 %v837, %v989
        %v991 = vrot.slane %v990, 2
        %v992 = vadd.f32 %v990, %v991
        %v993 = vrot.slane %v992, 1
        %v994 = vadd.f32 %v992, %v993
        %v995 = vrot.slane %v838, 4
        %v996 = vadd.f32 %v838, %v995
        %v997 = vrot.slane %v996, 2
        %v998 = vadd.f32 %v996, %v997
        %v999 = vrot.slane %v998, 1
        %v1000 = vadd.f32 %v998, %v999
        %v1001 = vrot.slane %v839, 4
        %v1002 = vadd.f32 %v839, %v1001
        %v1003 = vrot.slane %v1002, 2
        %v1004 = vadd.f32 %v1002, %v1003
        %v1005 = vrot.slane %v1004, 1
        %v1006 = vadd.f32 %v1004, %v1005
        %v1007 = vrot.slane %v840, 4
        %v1008 = vadd.f32 %v840, %v1007
        %v1009 = vrot.slane %v1008, 2
        %v1010 = vadd.f32 %v1008, %v1009
        %v1011 = vrot.slane %v1010, 1
        %v1012 = vadd.f32 %v1010, %v1011
        %v1013 = vrot.slane %v841, 4
        %v1014 = vadd.f32 %v841, %v1013
        %v1015 = vrot.slane %v1014, 2
        %v1016 = vadd.f32 %v1014, %v1015
        %v1017 = vrot.slane %v1016, 1
        %v1018 = vadd.f32 %v1016, %v1017
        %v1019 = vrot.slane %v842, 4
        %v1020 = vadd.f32 %v842, %v1019
        %v1021 = vrot.slane %v1020, 2
        %v1022 = vadd.f32 %v1020, %v1021
        %v1023 = vrot.slane %v1022, 1
        %v1024 = vadd.f32 %v1022, %v1023
        %v1025 = vrot.slane %v843, 4
        %v1026 = vadd.f32 %v843, %v1025
        %v1027 = vrot.slane %v1026, 2
        %v1028 = vadd.f32 %v1026, %v1027
        %v1029 = vrot.slane %v1028, 1
        %v1030 = vadd.f32 %v1028, %v1029
        %v1031 = vrot.slane %v844, 4
        %v1032 = vadd.f32 %v844, %v1031
        %v1033 = vrot.slane %v1032, 2
        %v1034 = vadd.f32 %v1032, %v1033
        %v1035 = vrot.slane %v1034, 1
        %v1036 = vadd.f32 %v1034, %v1035
        %v1037 = vmul.f32 %v850, 0.125
        %v1038 = vmul.f32 %v856, 0.125
        %v1039 = vmul.f32 %v862, 0.125
        %v1040 = vmul.f32 %v868, 0.125
        %v1041 = vmul.f32 %v874, 0.125
        %v1042 = vmul.f32 %v880, 0.125
        %v1043 = vmul.f32 %v886, 0.125
        %v1044 = vmul.f32 %v892, 0.125
        %v1045 = vmul.f32 %v898, 0.125
        %v1046 = vmul.f32 %v904, 0.125
        %v1047 = vmul.f32 %v910, 0.125
        %v1048 = vmul.f32 %v916, 0.125
        %v1049 = vmul.f32 %v922, 0.125
        %v1050 = vmul.f32 %v928, 0.125
        %v1051 = vmul.f32 %v934, 0.125
        %v1052 = vmul.f32 %v940, 0.125
        %v1053 = vmul.f32 %v946, 0.125
        %v1054 = vmul.f32 %v952, 0.125
        %v1055 = vmul.f32 %v958, 0.125
        %v1056 = vmul.f32 %v964, 0.125
        %v1057 = vmul.f32 %v970, 0.125
        %v1058 = vmul.f32 %v976, 0.125
        %v1059 = vmul.f32 %v982, 0.125
        %v1060 = vmul.f32 %v988, 0.125
        %v1061 = vmul.f32 %v994, 0.125
        %v1062 = vmul.f32 %v1000, 0.125
        %v1063 = vmul.f32 %v1006, 0.125
        %v1064 = vmul.f32 %v1012, 0.125
        %v1065 = vmul.f32 %v1018, 0.125
        %v1066 = vmul.f32 %v1024, 0.125
        %v1067 = vmul.f32 %v1030, 0.125
        %v1068 = vmul.f32 %v1036, 0.125
        %v1069 = vadd.f32 %v1037, 1e-05
        %v1070 = vadd.f32 %v1038, 1e-05
        %v1071 = vadd.f32 %v1039, 1e-05
        %v1072 = vadd.f32 %v1040, 1e-05
        %v1073 = vadd.f32 %v1041, 1e-05
        %v1074 = vadd.f32 %v1042, 1e-05
        %v1075 = vadd.f32 %v1043, 1e-05
        %v1076 = vadd.f32 %v1044, 1e-05
        %v1077 = vadd.f32 %v1045, 1e-05
        %v1078 = vadd.f32 %v1046, 1e-05
        %v1079 = vadd.f32 %v1047, 1e-05
        %v1080 = vadd.f32 %v1048, 1e-05
        %v1081 = vadd.f32 %v1049, 1e-05
        %v1082 = vadd.f32 %v1050, 1e-05
        %v1083 = vadd.f32 %v1051, 1e-05
        %v1084 = vadd.f32 %v1052, 1e-05
        %v1085 = vadd.f32 %v1053, 1e-05
        %v1086 = vadd.f32 %v1054, 1e-05
        %v1087 = vadd.f32 %v1055, 1e-05
        %v1088 = vadd.f32 %v1056, 1e-05
        %v1089 = vadd.f32 %v1057, 1e-05
        %v1090 = vadd.f32 %v1058, 1e-05
        %v1091 = vadd.f32 %v1059, 1e-05
        %v1092 = vadd.f32 %v1060, 1e-05
        %v1093 = vadd.f32 %v1061, 1e-05
        %v1094 = vadd.f32 %v1062, 1e-05
        %v1095 = vadd.f32 %v1063, 1e-05
        %v1096 = vadd.f32 %v1064, 1e-05
        %v1097 = vadd.f32 %v1065, 1e-05
        %v1098 = vadd.f32 %v1066, 1e-05
        %v1099 = vadd.f32 %v1067, 1e-05
        %v1100 = vadd.f32 %v1068, 1e-05
        %v1101 = vrsqrt.pop %v1069
        %v1102 = vmul.f32 %v1101, %v1069
        %v1103 = vmul.f32 %v1102, %v1101
        %v1104 = vmul.f32 0.5, %v1103
        %v1105 = vsub.f32 1.5, %v1104
        %v1106 = vmul.f32 %v1101, %v1105
        %vm1107 = vweird.f32 %v1069
        %vm1108 = vweird.f32 %v1101
        %vm1109 = vmor %vm1107, %vm1108
        %v1110 = vsel %vm1109, %v1101, %v1106
        %v1111 = vrsqrt.pop %v1070
        %v1112 = vmul.f32 %v1111, %v1070
        %v1113 = vmul.f32 %v1112, %v1111
        %v1114 = vmul.f32 0.5, %v1113
        %v1115 = vsub.f32 1.5, %v1114
        %v1116 = vmul.f32 %v1111, %v1115
        %vm1117 = vweird.f32 %v1070
        %vm1118 = vweird.f32 %v1111
        %vm1119 = vmor %vm1117, %vm1118
        %v1120 = vsel %vm1119, %v1111, %v1116
        %v1121 = vrsqrt.pop %v1071
        %v1122 = vmul.f32 %v1121, %v1071
        %v1123 = vmul.f32 %v1122, %v1121
        %v1124 = vmul.f32 0.5, %v1123
        %v1125 = vsub.f32 1.5, %v1124
        %v1126 = vmul.f32 %v1121, %v1125
        %vm1127 = vweird.f32 %v1071
        %vm1128 = vweird.f32 %v1121
        %vm1129 = vmor %vm1127, %vm1128
        %v1130 = vsel %vm1129, %v1121, %v1126
        %v1131 = vrsqrt.pop %v1072
        %v1132 = vmul.f32 %v1131, %v1072
        %v1133 = vmul.f32 %v1132, %v1131
        %v1134 = vmul.f32 0.5, %v1133
        %v1135 = vsub.f32 1.5, %v1134
        %v1136 = vmul.f32 %v1131, %v1135
        %vm1137 = vweird.f32 %v1072
        %vm1138 = vweird.f32 %v1131
        %vm1139 = vmor %vm1137, %vm1138
        %v1140 = vsel %vm1139, %v1131, %v1136
        %v1141 = vrsqrt.pop %v1073
        %v1142 = vmul.f32 %v1141, %v1073
        %v1143 = vmul.f32 %v1142, %v1141
        %v1144 = vmul.f32 0.5, %v1143
        %v1145 = vsub.f32 1.5, %v1144
        %v1146 = vmul.f32 %v1141, %v1145
        %vm1147 = vweird.f32 %v1073
        %vm1148 = vweird.f32 %v1141
        %vm1149 = vmor %vm1147, %vm1148
        %v1150 = vsel %vm1149, %v1141, %v1146
        %v1151 = vrsqrt.pop %v1074
        %v1152 = vmul.f32 %v1151, %v1074
        %v1153 = vmul.f32 %v1152, %v1151
        %v1154 = vmul.f32 0.5, %v1153
        %v1155 = vsub.f32 1.5, %v1154
        %v1156 = vmul.f32 %v1151, %v1155
        %vm1157 = vweird.f32 %v1074
        %vm1158 = vweird.f32 %v1151
        %vm1159 = vmor %vm1157, %vm1158
        %v1160 = vsel %vm1159, %v1151, %v1156
        %v1161 = vrsqrt.pop %v1075
        %v1162 = vmul.f32 %v1161, %v1075
        %v1163 = vmul.f32 %v1162, %v1161
        %v1164 = vmul.f32 0.5, %v1163
        %v1165 = vsub.f32 1.5, %v1164
        %v1166 = vmul.f32 %v1161, %v1165
        %vm1167 = vweird.f32 %v1075
        %vm1168 = vweird.f32 %v1161
        %vm1169 = vmor %vm1167, %vm1168
        %v1170 = vsel %vm1169, %v1161, %v1166
        %v1171 = vrsqrt.pop %v1076
        %v1172 = vmul.f32 %v1171, %v1076
        %v1173 = vmul.f32 %v1172, %v1171
        %v1174 = vmul.f32 0.5, %v1173
        %v1175 = vsub.f32 1.5, %v1174
        %v1176 = vmul.f32 %v1171, %v1175
        %vm1177 = vweird.f32 %v1076
        %vm1178 = vweird.f32 %v1171
        %vm1179 = vmor %vm1177, %vm1178
        %v1180 = vsel %vm1179, %v1171, %v1176
        %v1181 = vrsqrt.pop %v1077
        %v1182 = vmul.f32 %v1181, %v1077
        %v1183 = vmul.f32 %v1182, %v1181
        %v1184 = vmul.f32 0.5, %v1183
        %v1185 = vsub.f32 1.5, %v1184
        %v1186 = vmul.f32 %v1181, %v1185
        %vm1187 = vweird.f32 %v1077
        %vm1188 = vweird.f32 %v1181
        %vm1189 = vmor %vm1187, %vm1188
        %v1190 = vsel %vm1189, %v1181, %v1186
        %v1191 = vrsqrt.pop %v1078
        %v1192 = vmul.f32 %v1191, %v1078
        %v1193 = vmul.f32 %v1192, %v1191
        %v1194 = vmul.f32 0.5, %v1193
        %v1195 = vsub.f32 1.5, %v1194
        %v1196 = vmul.f32 %v1191, %v1195
        %vm1197 = vweird.f32 %v1078
        %vm1198 = vweird.f32 %v1191
        %vm1199 = vmor %vm1197, %vm1198
        %v1200 = vsel %vm1199, %v1191, %v1196
        %v1201 = vrsqrt.pop %v1079
        %v1202 = vmul.f32 %v1201, %v1079
        %v1203 = vmul.f32 %v1202, %v1201
        %v1204 = vmul.f32 0.5, %v1203
        %v1205 = vsub.f32 1.5, %v1204
        %v1206 = vmul.f32 %v1201, %v1205
        %vm1207 = vweird.f32 %v1079
        %vm1208 = vweird.f32 %v1201
        %vm1209 = vmor %vm1207, %vm1208
        %v1210 = vsel %vm1209, %v1201, %v1206
        %v1211 = vrsqrt.pop %v1080
        %v1212 = vmul.f32 %v1211, %v1080
        %v1213 = vmul.f32 %v1212, %v1211
        %v1214 = vmul.f32 0.5, %v1213
        %v1215 = vsub.f32 1.5, %v1214
        %v1216 = vmul.f32 %v1211, %v1215
        %vm1217 = vweird.f32 %v1080
        %vm1218 = vweird.f32 %v1211
        %vm1219 = vmor %vm1217, %vm1218
        %v1220 = vsel %vm1219, %v1211, %v1216
        %v1221 = vrsqrt.pop %v1081
        %v1222 = vmul.f32 %v1221, %v1081
        %v1223 = vmul.f32 %v1222, %v1221
        %v1224 = vmul.f32 0.5, %v1223
        %v1225 = vsub.f32 1.5, %v1224
        %v1226 = vmul.f32 %v1221, %v1225
        %vm1227 = vweird.f32 %v1081
        %vm1228 = vweird.f32 %v1221
        %vm1229 = vmor %vm1227, %vm1228
        %v1230 = vsel %vm1229, %v1221, %v1226
        %v1231 = vrsqrt.pop %v1082
        %v1232 = vmul.f32 %v1231, %v1082
        %v1233 = vmul.f32 %v1232, %v1231
        %v1234 = vmul.f32 0.5, %v1233
        %v1235 = vsub.f32 1.5, %v1234
        %v1236 = vmul.f32 %v1231, %v1235
        %vm1237 = vweird.f32 %v1082
        %vm1238 = vweird.f32 %v1231
        %vm1239 = vmor %vm1237, %vm1238
        %v1240 = vsel %vm1239, %v1231, %v1236
        %v1241 = vrsqrt.pop %v1083
        %v1242 = vmul.f32 %v1241, %v1083
        %v1243 = vmul.f32 %v1242, %v1241
        %v1244 = vmul.f32 0.5, %v1243
        %v1245 = vsub.f32 1.5, %v1244
        %v1246 = vmul.f32 %v1241, %v1245
        %vm1247 = vweird.f32 %v1083
        %vm1248 = vweird.f32 %v1241
        %vm1249 = vmor %vm1247, %vm1248
        %v1250 = vsel %vm1249, %v1241, %v1246
        %v1251 = vrsqrt.pop %v1084
        %v1252 = vmul.f32 %v1251, %v1084
        %v1253 = vmul.f32 %v1252, %v1251
        %v1254 = vmul.f32 0.5, %v1253
        %v1255 = vsub.f32 1.5, %v1254
        %v1256 = vmul.f32 %v1251, %v1255
        %vm1257 = vweird.f32 %v1084
        %vm1258 = vweird.f32 %v1251
        %vm1259 = vmor %vm1257, %vm1258
        %v1260 = vsel %vm1259, %v1251, %v1256
        %v1261 = vrsqrt.pop %v1085
        %v1262 = vmul.f32 %v1261, %v1085
        %v1263 = vmul.f32 %v1262, %v1261
        %v1264 = vmul.f32 0.5, %v1263
        %v1265 = vsub.f32 1.5, %v1264
        %v1266 = vmul.f32 %v1261, %v1265
        %vm1267 = vweird.f32 %v1085
        %vm1268 = vweird.f32 %v1261
        %vm1269 = vmor %vm1267, %vm1268
        %v1270 = vsel %vm1269, %v1261, %v1266
        %v1271 = vrsqrt.pop %v1086
        %v1272 = vmul.f32 %v1271, %v1086
        %v1273 = vmul.f32 %v1272, %v1271
        %v1274 = vmul.f32 0.5, %v1273
        %v1275 = vsub.f32 1.5, %v1274
        %v1276 = vmul.f32 %v1271, %v1275
        %vm1277 = vweird.f32 %v1086
        %vm1278 = vweird.f32 %v1271
        %vm1279 = vmor %vm1277, %vm1278
        %v1280 = vsel %vm1279, %v1271, %v1276
        %v1281 = vrsqrt.pop %v1087
        %v1282 = vmul.f32 %v1281, %v1087
        %v1283 = vmul.f32 %v1282, %v1281
        %v1284 = vmul.f32 0.5, %v1283
        %v1285 = vsub.f32 1.5, %v1284
        %v1286 = vmul.f32 %v1281, %v1285
        %vm1287 = vweird.f32 %v1087
        %vm1288 = vweird.f32 %v1281
        %vm1289 = vmor %vm1287, %vm1288
        %v1290 = vsel %vm1289, %v1281, %v1286
        %v1291 = vrsqrt.pop %v1088
        %v1292 = vmul.f32 %v1291, %v1088
        %v1293 = vmul.f32 %v1292, %v1291
        %v1294 = vmul.f32 0.5, %v1293
        %v1295 = vsub.f32 1.5, %v1294
        %v1296 = vmul.f32 %v1291, %v1295
        %vm1297 = vweird.f32 %v1088
        %vm1298 = vweird.f32 %v1291
        %vm1299 = vmor %vm1297, %vm1298
        %v1300 = vsel %vm1299, %v1291, %v1296
        %v1301 = vrsqrt.pop %v1089
        %v1302 = vmul.f32 %v1301, %v1089
        %v1303 = vmul.f32 %v1302, %v1301
        %v1304 = vmul.f32 0.5, %v1303
        %v1305 = vsub.f32 1.5, %v1304
        %v1306 = vmul.f32 %v1301, %v1305
        %vm1307 = vweird.f32 %v1089
        %vm1308 = vweird.f32 %v1301
        %vm1309 = vmor %vm1307, %vm1308
        %v1310 = vsel %vm1309, %v1301, %v1306
        %v1311 = vrsqrt.pop %v1090
        %v1312 = vmul.f32 %v1311, %v1090
        %v1313 = vmul.f32 %v1312, %v1311
        %v1314 = vmul.f32 0.5, %v1313
        %v1315 = vsub.f32 1.5, %v1314
        %v1316 = vmul.f32 %v1311, %v1315
        %vm1317 = vweird.f32 %v1090
        %vm1318 = vweird.f32 %v1311
        %vm1319 = vmor %vm1317, %vm1318
        %v1320 = vsel %vm1319, %v1311, %v1316
        %v1321 = vrsqrt.pop %v1091
        %v1322 = vmul.f32 %v1321, %v1091
        %v1323 = vmul.f32 %v1322, %v1321
        %v1324 = vmul.f32 0.5, %v1323
        %v1325 = vsub.f32 1.5, %v1324
        %v1326 = vmul.f32 %v1321, %v1325
        %vm1327 = vweird.f32 %v1091
        %vm1328 = vweird.f32 %v1321
        %vm1329 = vmor %vm1327, %vm1328
        %v1330 = vsel %vm1329, %v1321, %v1326
        %v1331 = vrsqrt.pop %v1092
        %v1332 = vmul.f32 %v1331, %v1092
        %v1333 = vmul.f32 %v1332, %v1331
        %v1334 = vmul.f32 0.5, %v1333
        %v1335 = vsub.f32 1.5, %v1334
        %v1336 = vmul.f32 %v1331, %v1335
        %vm1337 = vweird.f32 %v1092
        %vm1338 = vweird.f32 %v1331
        %vm1339 = vmor %vm1337, %vm1338
        %v1340 = vsel %vm1339, %v1331, %v1336
        %v1341 = vrsqrt.pop %v1093
        %v1342 = vmul.f32 %v1341, %v1093
        %v1343 = vmul.f32 %v1342, %v1341
        %v1344 = vmul.f32 0.5, %v1343
        %v1345 = vsub.f32 1.5, %v1344
        %v1346 = vmul.f32 %v1341, %v1345
        %vm1347 = vweird.f32 %v1093
        %vm1348 = vweird.f32 %v1341
        %vm1349 = vmor %vm1347, %vm1348
        %v1350 = vsel %vm1349, %v1341, %v1346
        %v1351 = vrsqrt.pop %v1094
        %v1352 = vmul.f32 %v1351, %v1094
        %v1353 = vmul.f32 %v1352, %v1351
        %v1354 = vmul.f32 0.5, %v1353
        %v1355 = vsub.f32 1.5, %v1354
        %v1356 = vmul.f32 %v1351, %v1355
        %vm1357 = vweird.f32 %v1094
        %vm1358 = vweird.f32 %v1351
        %vm1359 = vmor %vm1357, %vm1358
        %v1360 = vsel %vm1359, %v1351, %v1356
        %v1361 = vrsqrt.pop %v1095
        %v1362 = vmul.f32 %v1361, %v1095
        %v1363 = vmul.f32 %v1362, %v1361
        %v1364 = vmul.f32 0.5, %v1363
        %v1365 = vsub.f32 1.5, %v1364
        %v1366 = vmul.f32 %v1361, %v1365
        %vm1367 = vweird.f32 %v1095
        %vm1368 = vweird.f32 %v1361
        %vm1369 = vmor %vm1367, %vm1368
        %v1370 = vsel %vm1369, %v1361, %v1366
        %v1371 = vrsqrt.pop %v1096
        %v1372 = vmul.f32 %v1371, %v1096
        %v1373 = vmul.f32 %v1372, %v1371
        %v1374 = vmul.f32 0.5, %v1373
        %v1375 = vsub.f32 1.5, %v1374
        %v1376 = vmul.f32 %v1371, %v1375
        %vm1377 = vweird.f32 %v1096
        %vm1378 = vweird.f32 %v1371
        %vm1379 = vmor %vm1377, %vm1378
        %v1380 = vsel %vm1379, %v1371, %v1376
        %v1381 = vrsqrt.pop %v1097
        %v1382 = vmul.f32 %v1381, %v1097
        %v1383 = vmul.f32 %v1382, %v1381
        %v1384 = vmul.f32 0.5, %v1383
        %v1385 = vsub.f32 1.5, %v1384
        %v1386 = vmul.f32 %v1381, %v1385
        %vm1387 = vweird.f32 %v1097
        %vm1388 = vweird.f32 %v1381
        %vm1389 = vmor %vm1387, %vm1388
        %v1390 = vsel %vm1389, %v1381, %v1386
        %v1391 = vrsqrt.pop %v1098
        %v1392 = vmul.f32 %v1391, %v1098
        %v1393 = vmul.f32 %v1392, %v1391
        %v1394 = vmul.f32 0.5, %v1393
        %v1395 = vsub.f32 1.5, %v1394
        %v1396 = vmul.f32 %v1391, %v1395
        %vm1397 = vweird.f32 %v1098
        %vm1398 = vweird.f32 %v1391
        %vm1399 = vmor %vm1397, %vm1398
        %v1400 = vsel %vm1399, %v1391, %v1396
        %v1401 = vrsqrt.pop %v1099
        %v1402 = vmul.f32 %v1401, %v1099
        %v1403 = vmul.f32 %v1402, %v1401
        %v1404 = vmul.f32 0.5, %v1403
        %v1405 = vsub.f32 1.5, %v1404
        %v1406 = vmul.f32 %v1401, %v1405
        %vm1407 = vweird.f32 %v1099
        %vm1408 = vweird.f32 %v1401
        %vm1409 = vmor %vm1407, %vm1408
        %v1410 = vsel %vm1409, %v1401, %v1406
        %v1411 = vrsqrt.pop %v1100
        %v1412 = vmul.f32 %v1411, %v1100
        %v1413 = vmul.f32 %v1412, %v1411
        %v1414 = vmul.f32 0.5, %v1413
        %v1415 = vsub.f32 1.5, %v1414
        %v1416 = vmul.f32 %v1411, %v1415
        %vm1417 = vweird.f32 %v1100
        %vm1418 = vweird.f32 %v1411
        %vm1419 = vmor %vm1417, %vm1418
        %v1420 = vsel %vm1419, %v1411, %v1416
        %v1421 = vmul.f32 %v290, %v1110
        %v1422 = vmul.f32 %v290, %v1120
        %v1423 = vmul.f32 %v290, %v1130
        %v1424 = vmul.f32 %v290, %v1140
        %v1425 = vmul.f32 %v290, %v1150
        %v1426 = vmul.f32 %v290, %v1160
        %v1427 = vmul.f32 %v290, %v1170
        %v1428 = vmul.f32 %v290, %v1180
        %v1429 = vmul.f32 %v290, %v1190
        %v1430 = vmul.f32 %v290, %v1200
        %v1431 = vmul.f32 %v290, %v1210
        %v1432 = vmul.f32 %v290, %v1220
        %v1433 = vmul.f32 %v290, %v1230
        %v1434 = vmul.f32 %v290, %v1240
        %v1435 = vmul.f32 %v290, %v1250
        %v1436 = vmul.f32 %v290, %v1260
        %v1437 = vmul.f32 %v290, %v1270
        %v1438 = vmul.f32 %v290, %v1280
        %v1439 = vmul.f32 %v290, %v1290
        %v1440 = vmul.f32 %v290, %v1300
        %v1441 = vmul.f32 %v290, %v1310
        %v1442 = vmul.f32 %v290, %v1320
        %v1443 = vmul.f32 %v290, %v1330
        %v1444 = vmul.f32 %v290, %v1340
        %v1445 = vmul.f32 %v290, %v1350
        %v1446 = vmul.f32 %v290, %v1360
        %v1447 = vmul.f32 %v290, %v1370
        %v1448 = vmul.f32 %v290, %v1380
        %v1449 = vmul.f32 %v290, %v1390
        %v1450 = vmul.f32 %v290, %v1400
        %v1451 = vmul.f32 %v290, %v1410
        %v1452 = vmul.f32 %v290, %v1420
        %v1453 = vperm.slane %v1421, 1
        %v1454 = vperm.slane %v1422, 1
        %v1455 = vperm.slane %v1423, 1
        %v1456 = vperm.slane %v1424, 1
        %v1457 = vperm.slane %v1425, 1
        %v1458 = vperm.slane %v1426, 1
        %v1459 = vperm.slane %v1427, 1
        %v1460 = vperm.slane %v1428, 1
        %v1461 = vperm.slane %v1429, 1
        %v1462 = vperm.slane %v1430, 1
        %v1463 = vperm.slane %v1431, 1
        %v1464 = vperm.slane %v1432, 1
        %v1465 = vperm.slane %v1433, 1
        %v1466 = vperm.slane %v1434, 1
        %v1467 = vperm.slane %v1435, 1
        %v1468 = vperm.slane %v1436, 1
        %v1469 = vperm.slane %v1437, 1
        %v1470 = vperm.slane %v1438, 1
        %v1471 = vperm.slane %v1439, 1
        %v1472 = vperm.slane %v1440, 1
        %v1473 = vperm.slane %v1441, 1
        %v1474 = vperm.slane %v1442, 1
        %v1475 = vperm.slane %v1443, 1
        %v1476 = vperm.slane %v1444, 1
        %v1477 = vperm.slane %v1445, 1
        %v1478 = vperm.slane %v1446, 1
        %v1479 = vperm.slane %v1447, 1
        %v1480 = vperm.slane %v1448, 1
        %v1481 = vperm.slane %v1449, 1
        %v1482 = vperm.slane %v1450, 1
        %v1483 = vperm.slane %v1451, 1
        %v1484 = vperm.slane %v1452, 1
        %v1485 = vmul.f32 %v781, %v1453
        %v1486 = vmul.f32 %v782, %v1454
        %v1487 = vmul.f32 %v783, %v1455
        %v1488 = vmul.f32 %v784, %v1456
        %v1489 = vmul.f32 %v785, %v1457
        %v1490 = vmul.f32 %v786, %v1458
        %v1491 = vmul.f32 %v787, %v1459
        %v1492 = vmul.f32 %v788, %v1460
        %v1493 = vmul.f32 %v789, %v1461
        %v1494 = vmul.f32 %v790, %v1462
        %v1495 = vmul.f32 %v791, %v1463
        %v1496 = vmul.f32 %v792, %v1464
        %v1497 = vmul.f32 %v793, %v1465
        %v1498 = vmul.f32 %v794, %v1466
        %v1499 = vmul.f32 %v795, %v1467
        %v1500 = vmul.f32 %v796, %v1468
        %v1501 = vmul.f32 %v797, %v1469
        %v1502 = vmul.f32 %v798, %v1470
        %v1503 = vmul.f32 %v799, %v1471
        %v1504 = vmul.f32 %v800, %v1472
        %v1505 = vmul.f32 %v801, %v1473
        %v1506 = vmul.f32 %v802, %v1474
        %v1507 = vmul.f32 %v803, %v1475
        %v1508 = vmul.f32 %v804, %v1476
        %v1509 = vmul.f32 %v805, %v1477
        %v1510 = vmul.f32 %v806, %v1478
        %v1511 = vmul.f32 %v807, %v1479
        %v1512 = vmul.f32 %v808, %v1480
        %v1513 = vmul.f32 %v809, %v1481
        %v1514 = vmul.f32 %v810, %v1482
        %v1515 = vmul.f32 %v811, %v1483
        %v1516 = vmul.f32 %v812, %v1484
        %v1517 = vperm.slane %v290, 2
        %v1518 = vadd.f32 %v1485, %v1517
        %v1519 = vadd.f32 %v1486, %v1517
        %v1520 = vadd.f32 %v1487, %v1517
        %v1521 = vadd.f32 %v1488, %v1517
        %v1522 = vadd.f32 %v1489, %v1517
        %v1523 = vadd.f32 %v1490, %v1517
        %v1524 = vadd.f32 %v1491, %v1517
        %v1525 = vadd.f32 %v1492, %v1517
        %v1526 = vadd.f32 %v1493, %v1517
        %v1527 = vadd.f32 %v1494, %v1517
        %v1528 = vadd.f32 %v1495, %v1517
        %v1529 = vadd.f32 %v1496, %v1517
        %v1530 = vadd.f32 %v1497, %v1517
        %v1531 = vadd.f32 %v1498, %v1517
        %v1532 = vadd.f32 %v1499, %v1517
        %v1533 = vadd.f32 %v1500, %v1517
        %v1534 = vadd.f32 %v1501, %v1517
        %v1535 = vadd.f32 %v1502, %v1517
        %v1536 = vadd.f32 %v1503, %v1517
        %v1537 = vadd.f32 %v1504, %v1517
        %v1538 = vadd.f32 %v1505, %v1517
        %v1539 = vadd.f32 %v1506, %v1517
        %v1540 = vadd.f32 %v1507, %v1517
        %v1541 = vadd.f32 %v1508, %v1517
        %v1542 = vadd.f32 %v1509, %v1517
        %v1543 = vadd.f32 %v1510, %v1517
        %v1544 = vadd.f32 %v1511, %v1517
        %v1545 = vadd.f32 %v1512, %v1517
        %v1546 = vadd.f32 %v1513, %v1517
        %v1547 = vadd.f32 %v1514, %v1517
        %v1548 = vadd.f32 %v1515, %v1517
        %v1549 = vadd.f32 %v1516, %v1517
        %v1550 = vld [vmem:[%s252] sm:$0xff]
        %v1551 = vld [vmem:[%s252 + $0x8] sm:$0xff]
        %v1552 = vld [vmem:[%s252 + $0x10] sm:$0xff]
        %v1553 = vld [vmem:[%s252 + $0x18] sm:$0xff]
        %v1554 = vld [vmem:[%s252 + $0x20] sm:$0xff]
        %v1555 = vld [vmem:[%s252 + $0x28] sm:$0xff]
        %v1556 = vld [vmem:[%s252 + $0x30] sm:$0xff]
        %v1557 = vld [vmem:[%s252 + $0x38] sm:$0xff]
        %v1558 = vld [vmem:[%s252 + $0x40] sm:$0xff]
        %v1559 = vld [vmem:[%s252 + $0x48] sm:$0xff]
        %v1560 = vld [vmem:[%s252 + $0x50] sm:$0xff]
        %v1561 = vld [vmem:[%s252 + $0x58] sm:$0xff]
        %v1562 = vld [vmem:[%s252 + $0x60] sm:$0xff]
        %v1563 = vld [vmem:[%s252 + $0x68] sm:$0xff]
        %v1564 = vld [vmem:[%s252 + $0x70] sm:$0xff]
        %v1565 = vld [vmem:[%s252 + $0x78] sm:$0xff]
        %v1566 = vld [vmem:[%s252 + $0x80] sm:$0xff]
        %v1567 = vld [vmem:[%s252 + $0x88] sm:$0xff]
        %v1568 = vld [vmem:[%s252 + $0x90] sm:$0xff]
        %v1569 = vld [vmem:[%s252 + $0x98] sm:$0xff]
        %v1570 = vld [vmem:[%s252 + $0xa0] sm:$0xff]
        %v1571 = vld [vmem:[%s252 + $0xa8] sm:$0xff]
        %v1572 = vld [vmem:[%s252 + $0xb0] sm:$0xff]
        %v1573 = vld [vmem:[%s252 + $0xb8] sm:$0xff]
        %v1574 = vld [vmem:[%s252 + $0xc0] sm:$0xff]
        %v1575 = vld [vmem:[%s252 + $0xc8] sm:$0xff]
        %v1576 = vld [vmem:[%s252 + $0xd0] sm:$0xff]
        %v1577 = vld [vmem:[%s252 + $0xd8] sm:$0xff]
        %v1578 = vld [vmem:[%s252 + $0xe0] sm:$0xff]
        %v1579 = vld [vmem:[%s252 + $0xe8] sm:$0xff]
        %v1580 = vld [vmem:[%s252 + $0xf0] sm:$0xff]
        %v1581 = vld [vmem:[%s252 + $0xf8] sm:$0xff]
        %v1582 = vadd.f32 %v1518, %v1550
        %v1583 = vadd.f32 %v1519, %v1551
        %v1584 = vadd.f32 %v1520, %v1552
        %v1585 = vadd.f32 %v1521, %v1553
        %v1586 = vadd.f32 %v1522, %v1554
        %v1587 = vadd.f32 %v1523, %v1555
        %v1588 = vadd.f32 %v1524, %v1556
        %v1589 = vadd.f32 %v1525, %v1557
        %v1590 = vadd.f32 %v1526, %v1558
        %v1591 = vadd.f32 %v1527, %v1559
        %v1592 = vadd.f32 %v1528, %v1560
        %v1593 = vadd.f32 %v1529, %v1561
        %v1594 = vadd.f32 %v1530, %v1562
        %v1595 = vadd.f32 %v1531, %v1563
        %v1596 = vadd.f32 %v1532, %v1564
        %v1597 = vadd.f32 %v1533, %v1565
        %v1598 = vadd.f32 %v1534, %v1566
        %v1599 = vadd.f32 %v1535, %v1567
        %v1600 = vadd.f32 %v1536, %v1568
        %v1601 = vadd.f32 %v1537, %v1569
        %v1602 = vadd.f32 %v1538, %v1570
        %v1603 = vadd.f32 %v1539, %v1571
        %v1604 = vadd.f32 %v1540, %v1572
        %v1605 = vadd.f32 %v1541, %v1573
        %v1606 = vadd.f32 %v1542, %v1574
        %v1607 = vadd.f32 %v1543, %v1575
        %v1608 = vadd.f32 %v1544, %v1576
        %v1609 = vadd.f32 %v1545, %v1577
        %v1610 = vadd.f32 %v1546, %v1578
        %v1611 = vadd.f32 %v1547, %v1579
        %v1612 = vadd.f32 %v1548, %v1580
        %v1613 = vadd.f32 %v1549, %v1581
        %v1614 = vperm.slane %v290, 3
        %v1615 = vmul.f32 %v1582, %v1614
        %v1616 = vmul.f32 %v1583, %v1614
        %v1617 = vmul.f32 %v1584, %v1614
        %v1618 = vmul.f32 %v1585, %v1614
        %v1619 = vmul.f32 %v1586, %v1614
        %v1620 = vmul.f32 %v1587, %v1614
        %v1621 = vmul.f32 %v1588, %v1614
        %v1622 = vmul.f32 %v1589, %v1614
        %v1623 = vmul.f32 %v1590, %v1614
        %v1624 = vmul.f32 %v1591, %v1614
        %v1625 = vmul.f32 %v1592, %v1614
        %v1626 = vmul.f32 %v1593, %v1614
        %v1627 = vmul.f32 %v1594, %v1614
        %v1628 = vmul.f32 %v1595, %v1614
        %v1629 = vmul.f32 %v1596, %v1614
        %v1630 = vmul.f32 %v1597, %v1614
        %v1631 = vmul.f32 %v1598, %v1614
        %v1632 = vmul.f32 %v1599, %v1614
        %v1633 = vmul.f32 %v1600, %v1614
        %v1634 = vmul.f32 %v1601, %v1614
        %v1635 = vmul.f32 %v1602, %v1614
        %v1636 = vmul.f32 %v1603, %v1614
        %v1637 = vmul.f32 %v1604, %v1614
        %v1638 = vmul.f32 %v1605, %v1614
        %v1639 = vmul.f32 %v1606, %v1614
        %v1640 = vmul.f32 %v1607, %v1614
        %v1641 = vmul.f32 %v1608, %v1614
        %v1642 = vmul.f32 %v1609, %v1614
        %v1643 = vmul.f32 %v1610, %v1614
        %v1644 = vmul.f32 %v1611, %v1614
        %v1645 = vmul.f32 %v1612, %v1614
        %v1646 = vmul.f32 %v1613, %v1614
        %1647 = vadd.xlane.f32.xlu0 %v1615
        %v1648 = vpop.xlane.xlu0 %1647
        %1649 = vadd.xlane.f32.xlu0 %v1616
        %v1650 = vpop.xlane.xlu0 %1649
        %1651 = vadd.xlane.f32.xlu0 %v1617
        %v1652 = vpop.xlane.xlu0 %1651
        %1653 = vadd.xlane.f32.xlu0 %v1618
        %v1654 = vpop.xlane.xlu0 %1653
        %1655 = vadd.xlane.f32.xlu0 %v1619
        %v1656 = vpop.xlane.xlu0 %1655
        %1657 = vadd.xlane.f32.xlu0 %v1620
        %v1658 = vpop.xlane.xlu0 %1657
        %1659 = vadd.xlane.f32.xlu0 %v1621
        %v1660 = vpop.xlane.xlu0 %1659
        %1661 = vadd.xlane.f32.xlu0 %v1622
        %v1662 = vpop.xlane.xlu0 %1661
        %1663 = vadd.xlane.f32.xlu0 %v1623
        %v1664 = vpop.xlane.xlu0 %1663
        %1665 = vadd.xlane.f32.xlu0 %v1624
        %v1666 = vpop.xlane.xlu0 %1665
        %1667 = vadd.xlane.f32.xlu0 %v1625
        %v1668 = vpop.xlane.xlu0 %1667
        %1669 = vadd.xlane.f32.xlu0 %v1626
        %v1670 = vpop.xlane.xlu0 %1669
        %1671 = vadd.xlane.f32.xlu0 %v1627
        %v1672 = vpop.xlane.xlu0 %1671
        %1673 = vadd.xlane.f32.xlu0 %v1628
        %v1674 = vpop.xlane.xlu0 %1673
        %1675 = vadd.xlane.f32.xlu0 %v1629
        %v1676 = vpop.xlane.xlu0 %1675
        %1677 = vadd.xlane.f32.xlu0 %v1630
        %v1678 = vpop.xlane.xlu0 %1677
        %1679 = vadd.xlane.f32.xlu0 %v1631
        %v1680 = vpop.xlane.xlu0 %1679
        %1681 = vadd.xlane.f32.xlu0 %v1632
        %v1682 = vpop.xlane.xlu0 %1681
        %1683 = vadd.xlane.f32.xlu0 %v1633
        %v1684 = vpop.xlane.xlu0 %1683
        %1685 = vadd.xlane.f32.xlu0 %v1634
        %v1686 = vpop.xlane.xlu0 %1685
        %1687 = vadd.xlane.f32.xlu0 %v1635
        %v1688 = vpop.xlane.xlu0 %1687
        %1689 = vadd.xlane.f32.xlu0 %v1636
        %v1690 = vpop.xlane.xlu0 %1689
        %1691 = vadd.xlane.f32.xlu0 %v1637
        %v1692 = vpop.xlane.xlu0 %1691
        %1693 = vadd.xlane.f32.xlu0 %v1638
        %v1694 = vpop.xlane.xlu0 %1693
        %1695 = vadd.xlane.f32.xlu0 %v1639
        %v1696 = vpop.xlane.xlu0 %1695
        %1697 = vadd.xlane.f32.xlu0 %v1640
        %v1698 = vpop.xlane.xlu0 %1697
        %1699 = vadd.xlane.f32.xlu0 %v1641
        %v1700 = vpop.xlane.xlu0 %1699
        %1701 = vadd.xlane.f32.xlu0 %v1642
        %v1702 = vpop.xlane.xlu0 %1701
        %1703 = vadd.xlane.f32.xlu0 %v1643
        %v1704 = vpop.xlane.xlu0 %1703
        %1705 = vadd.xlane.f32.xlu0 %v1644
        %v1706 = vpop.xlane.xlu0 %1705
        %1707 = vadd.xlane.f32.xlu0 %v1645
        %v1708 = vpop.xlane.xlu0 %1707
        %1709 = vadd.xlane.f32.xlu0 %v1646
        %v1710 = vpop.xlane.xlu0 %1709
        %s1711 = sld [smem:[#allocation2]]
        %v1712 = vstv %s1711
        %v1713 = vadd.f32 %v1648, %v1712
        %v1714 = vadd.f32 %v1650, %v1712
        %v1715 = vadd.f32 %v1652, %v1712
        %v1716 = vadd.f32 %v1654, %v1712
        %v1717 = vadd.f32 %v1656, %v1712
        %v1718 = vadd.f32 %v1658, %v1712
        %v1719 = vadd.f32 %v1660, %v1712
        %v1720 = vadd.f32 %v1662, %v1712
        %v1721 = vadd.f32 %v1664, %v1712
        %v1722 = vadd.f32 %v1666, %v1712
        %v1723 = vadd.f32 %v1668, %v1712
        %v1724 = vadd.f32 %v1670, %v1712
        %v1725 = vadd.f32 %v1672, %v1712
        %v1726 = vadd.f32 %v1674, %v1712
        %v1727 = vadd.f32 %v1676, %v1712
        %v1728 = vadd.f32 %v1678, %v1712
        %v1729 = vadd.f32 %v1680, %v1712
        %v1730 = vadd.f32 %v1682, %v1712
        %v1731 = vadd.f32 %v1684, %v1712
        %v1732 = vadd.f32 %v1686, %v1712
        %v1733 = vadd.f32 %v1688, %v1712
        %v1734 = vadd.f32 %v1690, %v1712
        %v1735 = vadd.f32 %v1692, %v1712
        %v1736 = vadd.f32 %v1694, %v1712
        %v1737 = vadd.f32 %v1696, %v1712
        %v1738 = vadd.f32 %v1698, %v1712
        %v1739 = vadd.f32 %v1700, %v1712
        %v1740 = vadd.f32 %v1702, %v1712
        %v1741 = vadd.f32 %v1704, %v1712
        %v1742 = vadd.f32 %v1706, %v1712
        %v1743 = vadd.f32 %v1708, %v1712
        %v1744 = vadd.f32 %v1710, %v1712
        %v1745 = vsub.f32 0.0, %v1713
        %v1746 = vsub.f32 0.0, %v1714
        %v1747 = vsub.f32 0.0, %v1715
        %v1748 = vsub.f32 0.0, %v1716
        %v1749 = vsub.f32 0.0, %v1717
        %v1750 = vsub.f32 0.0, %v1718
        %v1751 = vsub.f32 0.0, %v1719
        %v1752 = vsub.f32 0.0, %v1720
        %v1753 = vsub.f32 0.0, %v1721
        %v1754 = vsub.f32 0.0, %v1722
        %v1755 = vsub.f32 0.0, %v1723
        %v1756 = vsub.f32 0.0, %v1724
        %v1757 = vsub.f32 0.0, %v1725
        %v1758 = vsub.f32 0.0, %v1726
        %v1759 = vsub.f32 0.0, %v1727
        %v1760 = vsub.f32 0.0, %v1728
        %v1761 = vsub.f32 0.0, %v1729
        %v1762 = vsub.f32 0.0, %v1730
        %v1763 = vsub.f32 0.0, %v1731
        %v1764 = vsub.f32 0.0, %v1732
        %v1765 = vsub.f32 0.0, %v1733
        %v1766 = vsub.f32 0.0, %v1734
        %v1767 = vsub.f32 0.0, %v1735
        %v1768 = vsub.f32 0.0, %v1736
        %v1769 = vsub.f32 0.0, %v1737
        %v1770 = vsub.f32 0.0, %v1738
        %v1771 = vsub.f32 0.0, %v1739
        %v1772 = vsub.f32 0.0, %v1740
        %v1773 = vsub.f32 0.0, %v1741
        %v1774 = vsub.f32 0.0, %v1742
        %v1775 = vsub.f32 0.0, %v1743
        %v1776 = vsub.f32 0.0, %v1744
        %v1777 = vmul.f32 %v1745, 1.442695
        %v1778 = vpow.pop %v1777
        %v1779 = vmul.f32 %v1746, 1.442695
        %v1780 = vpow.pop %v1779
        %v1781 = vmul.f32 %v1747, 1.442695
        %v1782 = vpow.pop %v1781
        %v1783 = vmul.f32 %v1748, 1.442695
        %v1784 = vpow.pop %v1783
        %v1785 = vmul.f32 %v1749, 1.442695
        %v1786 = vpow.pop %v1785
        %v1787 = vmul.f32 %v1750, 1.442695
        %v1788 = vpow.pop %v1787
        %v1789 = vmul.f32 %v1751, 1.442695
        %v1790 = vpow.pop %v1789
        %v1791 = vmul.f32 %v1752, 1.442695
        %v1792 = vpow.pop %v1791
        %v1793 = vmul.f32 %v1753, 1.442695
        %v1794 = vpow.pop %v1793
        %v1795 = vmul.f32 %v1754, 1.442695
        %v1796 = vpow.pop %v1795
        %v1797 = vmul.f32 %v1755, 1.442695
        %v1798 = vpow.pop %v1797
        %v1799 = vmul.f32 %v1756, 1.442695
        %v1800 = vpow.pop %v1799
        %v1801 = vmul.f32 %v1757, 1.442695
        %v1802 = vpow.pop %v1801
        %v1803 = vmul.f32 %v1758, 1.442695
        %v1804 = vpow.pop %v1803
        %v1805 = vmul.f32 %v1759, 1.442695
        %v1806 = vpow.pop %v1805
        %v1807 = vmul.f32 %v1760, 1.442695
        %v1808 = vpow.pop %v1807
        %v1809 = vmul.f32 %v1761, 1.442695
        %v1810 = vpow.pop %v1809
        %v1811 = vmul.f32 %v1762, 1.442695
        %v1812 = vpow.pop %v1811
        %v1813 = vmul.f32 %v1763, 1.442695
        %v1814 = vpow.pop %v1813
        %v1815 = vmul.f32 %v1764, 1.442695
        %v1816 = vpow.pop %v1815
        %v1817 = vmul.f32 %v1765, 1.442695
        %v1818 = vpow.pop %v1817
        %v1819 = vmul.f32 %v1766, 1.442695
        %v1820 = vpow.pop %v1819
        %v1821 = vmul.f32 %v1767, 1.442695
        %v1822 = vpow.pop %v1821
        %v1823 = vmul.f32 %v1768, 1.442695
        %v1824 = vpow.pop %v1823
        %v1825 = vmul.f32 %v1769, 1.442695
        %v1826 = vpow.pop %v1825
        %v1827 = vmul.f32 %v1770, 1.442695
        %v1828 = vpow.pop %v1827
        %v1829 = vmul.f32 %v1771, 1.442695
        %v1830 = vpow.pop %v1829
        %v1831 = vmul.f32 %v1772, 1.442695
        %v1832 = vpow.pop %v1831
        %v1833 = vmul.f32 %v1773, 1.442695
        %v1834 = vpow.pop %v1833
        %v1835 = vmul.f32 %v1774, 1.442695
        %v1836 = vpow.pop %v1835
        %v1837 = vmul.f32 %v1775, 1.442695
        %v1838 = vpow.pop %v1837
        %v1839 = vmul.f32 %v1776, 1.442695
        %v1840 = vpow.pop %v1839
        %v1841 = vadd.f32 %v1778, 1.0
        %v1842 = vadd.f32 %v1780, 1.0
        %v1843 = vadd.f32 %v1782, 1.0
        %v1844 = vadd.f32 %v1784, 1.0
        %v1845 = vadd.f32 %v1786, 1.0
        %v1846 = vadd.f32 %v1788, 1.0
        %v1847 = vadd.f32 %v1790, 1.0
        %v1848 = vadd.f32 %v1792, 1.0
        %v1849 = vadd.f32 %v1794, 1.0
        %v1850 = vadd.f32 %v1796, 1.0
        %v1851 = vadd.f32 %v1798, 1.0
        %v1852 = vadd.f32 %v1800, 1.0
        %v1853 = vadd.f32 %v1802, 1.0
        %v1854 = vadd.f32 %v1804, 1.0
        %v1855 = vadd.f32 %v1806, 1.0
        %v1856 = vadd.f32 %v1808, 1.0
        %v1857 = vadd.f32 %v1810, 1.0
        %v1858 = vadd.f32 %v1812, 1.0
        %v1859 = vadd.f32 %v1814, 1.0
        %v1860 = vadd.f32 %v1816, 1.0
        %v1861 = vadd.f32 %v1818, 1.0
        %v1862 = vadd.f32 %v1820, 1.0
        %v1863 = vadd.f32 %v1822, 1.0
        %v1864 = vadd.f32 %v1824, 1.0
        %v1865 = vadd.f32 %v1826, 1.0
        %v1866 = vadd.f32 %v1828, 1.0
        %v1867 = vadd.f32 %v1830, 1.0
        %v1868 = vadd.f32 %v1832, 1.0
        %v1869 = vadd.f32 %v1834, 1.0
        %v1870 = vadd.f32 %v1836, 1.0
        %v1871 = vadd.f32 %v1838, 1.0
        %v1872 = vadd.f32 %v1840, 1.0
        %v1873 = vrcp.pop %v1841
        %v1874 = vrcp.pop %v1842
        %v1875 = vrcp.pop %v1843
        %v1876 = vrcp.pop %v1844
        %v1877 = vrcp.pop %v1845
        %v1878 = vrcp.pop %v1846
        %v1879 = vrcp.pop %v1847
        %v1880 = vrcp.pop %v1848
        %v1881 = vrcp.pop %v1849
        %v1882 = vrcp.pop %v1850
        %v1883 = vrcp.pop %v1851
        %v1884 = vrcp.pop %v1852
        %v1885 = vrcp.pop %v1853
        %v1886 = vrcp.pop %v1854
        %v1887 = vrcp.pop %v1855
        %v1888 = vrcp.pop %v1856
        %v1889 = vrcp.pop %v1857
        %v1890 = vrcp.pop %v1858
        %v1891 = vrcp.pop %v1859
        %v1892 = vrcp.pop %v1860
        %v1893 = vrcp.pop %v1861
        %v1894 = vrcp.pop %v1862
        %v1895 = vrcp.pop %v1863
        %v1896 = vrcp.pop %v1864
        %v1897 = vrcp.pop %v1865
        %v1898 = vrcp.pop %v1866
        %v1899 = vrcp.pop %v1867
        %v1900 = vrcp.pop %v1868
        %v1901 = vrcp.pop %v1869
        %v1902 = vrcp.pop %v1870
        %v1903 = vrcp.pop %v1871
        %v1904 = vrcp.pop %v1872
        %v1937 = vperm.slane %v1873, 0
        %v1938 = vperm.slane %v1873, 1
        %v1939 = vperm.slane %v1873, 2
        %v1940 = vperm.slane %v1873, 3
        %v1941 = vperm.slane %v1873, 4
        %v1942 = vperm.slane %v1873, 5
        %v1943 = vperm.slane %v1873, 6
        %v1944 = vperm.slane %v1873, 7
        %v1945 = vperm.slane %v1874, 0
        %v1946 = vperm.slane %v1874, 1
        %v1947 = vperm.slane %v1874, 2
        %v1948 = vperm.slane %v1874, 3
        %v1949 = vperm.slane %v1874, 4
        %v1950 = vperm.slane %v1874, 5
        %v1951 = vperm.slane %v1874, 6
        %v1952 = vperm.slane %v1874, 7
        %v1953 = vperm.slane %v1875, 0
        %v1954 = vperm.slane %v1875, 1
        %v1955 = vperm.slane %v1875, 2
        %v1956 = vperm.slane %v1875, 3
        %v1957 = vperm.slane %v1875, 4
        %v1958 = vperm.slane %v1875, 5
        %v1959 = vperm.slane %v1875, 6
        %v1960 = vperm.slane %v1875, 7
        %v1961 = vperm.slane %v1876, 0
        %v1962 = vperm.slane %v1876, 1
        %v1963 = vperm.slane %v1876, 2
        %v1964 = vperm.slane %v1876, 3
        %v1965 = vperm.slane %v1876, 4
        %v1966 = vperm.slane %v1876, 5
        %v1967 = vperm.slane %v1876, 6
        %v1968 = vperm.slane %v1876, 7
        %v1969 = vperm.slane %v1877, 0
        %v1970 = vperm.slane %v1877, 1
        %v1971 = vperm.slane %v1877, 2
        %v1972 = vperm.slane %v1877, 3
        %v1973 = vperm.slane %v1877, 4
        %v1974 = vperm.slane %v1877, 5
        %v1975 = vperm.slane %v1877, 6
        %v1976 = vperm.slane %v1877, 7
        %v1977 = vperm.slane %v1878, 0
        %v1978 = vperm.slane %v1878, 1
        %v1979 = vperm.slane %v1878, 2
        %v1980 = vperm.slane %v1878, 3
        %v1981 = vperm.slane %v1878, 4
        %v1982 = vperm.slane %v1878, 5
        %v1983 = vperm.slane %v1878, 6
        %v1984 = vperm.slane %v1878, 7
        %v1985 = vperm.slane %v1879, 0
        %v1986 = vperm.slane %v1879, 1
        %v1987 = vperm.slane %v1879, 2
        %v1988 = vperm.slane %v1879, 3
        %v1989 = vperm.slane %v1879, 4
        %v1990 = vperm.slane %v1879, 5
        %v1991 = vperm.slane %v1879, 6
        %v1992 = vperm.slane %v1879, 7
        %v1993 = vperm.slane %v1880, 0
        %v1994 = vperm.slane %v1880, 1
        %v1995 = vperm.slane %v1880, 2
        %v1996 = vperm.slane %v1880, 3
        %v1997 = vperm.slane %v1880, 4
        %v1998 = vperm.slane %v1880, 5
        %v1999 = vperm.slane %v1880, 6
        %v2000 = vperm.slane %v1880, 7
        %v2001 = vperm.slane %v1881, 0
        %v2002 = vperm.slane %v1881, 1
        %v2003 = vperm.slane %v1881, 2
        %v2004 = vperm.slane %v1881, 3
        %v2005 = vperm.slane %v1881, 4
        %v2006 = vperm.slane %v1881, 5
        %v2007 = vperm.slane %v1881, 6
        %v2008 = vperm.slane %v1881, 7
        %v2009 = vperm.slane %v1882, 0
        %v2010 = vperm.slane %v1882, 1
        %v2011 = vperm.slane %v1882, 2
        %v2012 = vperm.slane %v1882, 3
        %v2013 = vperm.slane %v1882, 4
        %v2014 = vperm.slane %v1882, 5
        %v2015 = vperm.slane %v1882, 6
        %v2016 = vperm.slane %v1882, 7
        %v2017 = vperm.slane %v1883, 0
        %v2018 = vperm.slane %v1883, 1
        %v2019 = vperm.slane %v1883, 2
        %v2020 = vperm.slane %v1883, 3
        %v2021 = vperm.slane %v1883, 4
        %v2022 = vperm.slane %v1883, 5
        %v2023 = vperm.slane %v1883, 6
        %v2024 = vperm.slane %v1883, 7
        %v2025 = vperm.slane %v1884, 0
        %v2026 = vperm.slane %v1884, 1
        %v2027 = vperm.slane %v1884, 2
        %v2028 = vperm.slane %v1884, 3
        %v2029 = vperm.slane %v1884, 4
        %v2030 = vperm.slane %v1884, 5
        %v2031 = vperm.slane %v1884, 6
        %v2032 = vperm.slane %v1884, 7
        %v2033 = vperm.slane %v1885, 0
        %v2034 = vperm.slane %v1885, 1
        %v2035 = vperm.slane %v1885, 2
        %v2036 = vperm.slane %v1885, 3
        %v2037 = vperm.slane %v1885, 4
        %v2038 = vperm.slane %v1885, 5
        %v2039 = vperm.slane %v1885, 6
        %v2040 = vperm.slane %v1885, 7
        %v2041 = vperm.slane %v1886, 0
        %v2042 = vperm.slane %v1886, 1
        %v2043 = vperm.slane %v1886, 2
        %v2044 = vperm.slane %v1886, 3
        %v2045 = vperm.slane %v1886, 4
        %v2046 = vperm.slane %v1886, 5
        %v2047 = vperm.slane %v1886, 6
        %v2048 = vperm.slane %v1886, 7
        %v2049 = vperm.slane %v1887, 0
        %v2050 = vperm.slane %v1887, 1
        %v2051 = vperm.slane %v1887, 2
        %v2052 = vperm.slane %v1887, 3
        %v2053 = vperm.slane %v1887, 4
        %v2054 = vperm.slane %v1887, 5
        %v2055 = vperm.slane %v1887, 6
        %v2056 = vperm.slane %v1887, 7
        %v2057 = vperm.slane %v1888, 0
        %v2058 = vperm.slane %v1888, 1
        %v2059 = vperm.slane %v1888, 2
        %v2060 = vperm.slane %v1888, 3
        %v2061 = vperm.slane %v1888, 4
        %v2062 = vperm.slane %v1888, 5
        %v2063 = vperm.slane %v1888, 6
        %v2064 = vperm.slane %v1888, 7
        %v2065 = vperm.slane %v1889, 0
        %v2066 = vperm.slane %v1889, 1
        %v2067 = vperm.slane %v1889, 2
        %v2068 = vperm.slane %v1889, 3
        %v2069 = vperm.slane %v1889, 4
        %v2070 = vperm.slane %v1889, 5
        %v2071 = vperm.slane %v1889, 6
        %v2072 = vperm.slane %v1889, 7
        %v2073 = vperm.slane %v1890, 0
        %v2074 = vperm.slane %v1890, 1
        %v2075 = vperm.slane %v1890, 2
        %v2076 = vperm.slane %v1890, 3
        %v2077 = vperm.slane %v1890, 4
        %v2078 = vperm.slane %v1890, 5
        %v2079 = vperm.slane %v1890, 6
        %v2080 = vperm.slane %v1890, 7
        %v2081 = vperm.slane %v1891, 0
        %v2082 = vperm.slane %v1891, 1
        %v2083 = vperm.slane %v1891, 2
        %v2084 = vperm.slane %v1891, 3
        %v2085 = vperm.slane %v1891, 4
        %v2086 = vperm.slane %v1891, 5
        %v2087 = vperm.slane %v1891, 6
        %v2088 = vperm.slane %v1891, 7
        %v2089 = vperm.slane %v1892, 0
        %v2090 = vperm.slane %v1892, 1
        %v2091 = vperm.slane %v1892, 2
        %v2092 = vperm.slane %v1892, 3
        %v2093 = vperm.slane %v1892, 4
        %v2094 = vperm.slane %v1892, 5
        %v2095 = vperm.slane %v1892, 6
        %v2096 = vperm.slane %v1892, 7
        %v2097 = vperm.slane %v1893, 0
        %v2098 = vperm.slane %v1893, 1
        %v2099 = vperm.slane %v1893, 2
        %v2100 = vperm.slane %v1893, 3
        %v2101 = vperm.slane %v1893, 4
        %v2102 = vperm.slane %v1893, 5
        %v2103 = vperm.slane %v1893, 6
        %v2104 = vperm.slane %v1893, 7
        %v2105 = vperm.slane %v1894, 0
        %v2106 = vperm.slane %v1894, 1
        %v2107 = vperm.slane %v1894, 2
        %v2108 = vperm.slane %v1894, 3
        %v2109 = vperm.slane %v1894, 4
        %v2110 = vperm.slane %v1894, 5
        %v2111 = vperm.slane %v1894, 6
        %v2112 = vperm.slane %v1894, 7
        %v2113 = vperm.slane %v1895, 0
        %v2114 = vperm.slane %v1895, 1
        %v2115 = vperm.slane %v1895, 2
        %v2116 = vperm.slane %v1895, 3
        %v2117 = vperm.slane %v1895, 4
        %v2118 = vperm.slane %v1895, 5
        %v2119 = vperm.slane %v1895, 6
        %v2120 = vperm.slane %v1895, 7
        %v2121 = vperm.slane %v1896, 0
        %v2122 = vperm.slane %v1896, 1
        %v2123 = vperm.slane %v1896, 2
        %v2124 = vperm.slane %v1896, 3
        %v2125 = vperm.slane %v1896, 4
        %v2126 = vperm.slane %v1896, 5
        %v2127 = vperm.slane %v1896, 6
        %v2128 = vperm.slane %v1896, 7
        %v2129 = vperm.slane %v1897, 0
        %v2130 = vperm.slane %v1897, 1
        %v2131 = vperm.slane %v1897, 2
        %v2132 = vperm.slane %v1897, 3
        %v2133 = vperm.slane %v1897, 4
        %v2134 = vperm.slane %v1897, 5
        %v2135 = vperm.slane %v1897, 6
        %v2136 = vperm.slane %v1897, 7
        %v2137 = vperm.slane %v1898, 0
        %v2138 = vperm.slane %v1898, 1
        %v2139 = vperm.slane %v1898, 2
        %v2140 = vperm.slane %v1898, 3
        %v2141 = vperm.slane %v1898, 4
        %v2142 = vperm.slane %v1898, 5
        %v2143 = vperm.slane %v1898, 6
        %v2144 = vperm.slane %v1898, 7
        %v2145 = vperm.slane %v1899, 0
        %v2146 = vperm.slane %v1899, 1
        %v2147 = vperm.slane %v1899, 2
        %v2148 = vperm.slane %v1899, 3
        %v2149 = vperm.slane %v1899, 4
        %v2150 = vperm.slane %v1899, 5
        %v2151 = vperm.slane %v1899, 6
        %v2152 = vperm.slane %v1899, 7
        %v2153 = vperm.slane %v1900, 0
        %v2154 = vperm.slane %v1900, 1
        %v2155 = vperm.slane %v1900, 2
        %v2156 = vperm.slane %v1900, 3
        %v2157 = vperm.slane %v1900, 4
        %v2158 = vperm.slane %v1900, 5
        %v2159 = vperm.slane %v1900, 6
        %v2160 = vperm.slane %v1900, 7
        %v2161 = vperm.slane %v1901, 0
        %v2162 = vperm.slane %v1901, 1
        %v2163 = vperm.slane %v1901, 2
        %v2164 = vperm.slane %v1901, 3
        %v2165 = vperm.slane %v1901, 4
        %v2166 = vperm.slane %v1901, 5
        %v2167 = vperm.slane %v1901, 6
        %v2168 = vperm.slane %v1901, 7
        %v2169 = vperm.slane %v1902, 0
        %v2170 = vperm.slane %v1902, 1
        %v2171 = vperm.slane %v1902, 2
        %v2172 = vperm.slane %v1902, 3
        %v2173 = vperm.slane %v1902, 4
        %v2174 = vperm.slane %v1902, 5
        %v2175 = vperm.slane %v1902, 6
        %v2176 = vperm.slane %v1902, 7
        %v2177 = vperm.slane %v1903, 0
        %v2178 = vperm.slane %v1903, 1
        %v2179 = vperm.slane %v1903, 2
        %v2180 = vperm.slane %v1903, 3
        %v2181 = vperm.slane %v1903, 4
        %v2182 = vperm.slane %v1903, 5
        %v2183 = vperm.slane %v1903, 6
        %v2184 = vperm.slane %v1903, 7
        %v2185 = vperm.slane %v1904, 0
        %v2186 = vperm.slane %v1904, 1
        %v2187 = vperm.slane %v1904, 2
        %v2188 = vperm.slane %v1904, 3
        %v2189 = vperm.slane %v1904, 4
        %v2190 = vperm.slane %v1904, 5
        %v2191 = vperm.slane %v1904, 6
        %v2192 = vperm.slane %v1904, 7
        %2193 = vst [vmem:[#allocation1] ss:$9 sm:$0xff] %v1937
        %s2194 = scalar_lea.vmem [#allocation1], 1
        %2195 = vst [vmem:[%s2194] ss:$9 sm:$0xff] %v1938
        %s2196 = scalar_lea.vmem [#allocation1], 2
        %2197 = vst [vmem:[%s2196] ss:$9 sm:$0xff] %v1939
        %s2198 = scalar_lea.vmem [#allocation1], 3
        %2199 = vst [vmem:[%s2198] ss:$9 sm:$0xff] %v1940
        %s2200 = scalar_lea.vmem [#allocation1], 4
        %2201 = vst [vmem:[%s2200] ss:$9 sm:$0xff] %v1941
        %s2202 = scalar_lea.vmem [#allocation1], 5
        %2203 = vst [vmem:[%s2202] ss:$9 sm:$0xff] %v1942
        %s2204 = scalar_lea.vmem [#allocation1], 6
        %2205 = vst [vmem:[%s2204] ss:$9 sm:$0xff] %v1943
        %s2206 = scalar_lea.vmem [#allocation1], 7
        %2207 = vst [vmem:[%s2206] ss:$9 sm:$0xff] %v1944
        %v2208 = vld [vmem:[#allocation1] sm:$0xff]
        %2209 = vst [vmem:[#allocation1] ss:$9 sm:$0xff] %v1945
        %2210 = vst [vmem:[%s2194] ss:$9 sm:$0xff] %v1946
        %2211 = vst [vmem:[%s2196] ss:$9 sm:$0xff] %v1947
        %2212 = vst [vmem:[%s2198] ss:$9 sm:$0xff] %v1948
        %2213 = vst [vmem:[%s2200] ss:$9 sm:$0xff] %v1949
        %2214 = vst [vmem:[%s2202] ss:$9 sm:$0xff] %v1950
        %2215 = vst [vmem:[%s2204] ss:$9 sm:$0xff] %v1951
        %2216 = vst [vmem:[%s2206] ss:$9 sm:$0xff] %v1952
        %v2217 = vld [vmem:[#allocation1] sm:$0xff]
        %2218 = vst [vmem:[#allocation1] ss:$9 sm:$0xff] %v1953
        %2219 = vst [vmem:[%s2194] ss:$9 sm:$0xff] %v1954
        %2220 = vst [vmem:[%s2196] ss:$9 sm:$0xff] %v1955
        %2221 = vst [vmem:[%s2198] ss:$9 sm:$0xff] %v1956
        %2222 = vst [vmem:[%s2200] ss:$9 sm:$0xff] %v1957
        %2223 = vst [vmem:[%s2202] ss:$9 sm:$0xff] %v1958
        %2224 = vst [vmem:[%s2204] ss:$9 sm:$0xff] %v1959
        %2225 = vst [vmem:[%s2206] ss:$9 sm:$0xff] %v1960
        %v2226 = vld [vmem:[#allocation1] sm:$0xff]
        %2227 = vst [vmem:[#allocation1] ss:$9 sm:$0xff] %v1961
        %2228 = vst [vmem:[%s2194] ss:$9 sm:$0xff] %v1962
        %2229 = vst [vmem:[%s2196] ss:$9 sm:$0xff] %v1963
        %2230 = vst [vmem:[%s2198] ss:$9 sm:$0xff] %v1964
        %2231 = vst [vmem:[%s2200] ss:$9 sm:$0xff] %v1965
        %2232 = vst [vmem:[%s2202] ss:$9 sm:$0xff] %v1966
        %2233 = vst [vmem:[%s2204] ss:$9 sm:$0xff] %v1967
        %2234 = vst [vmem:[%s2206] ss:$9 sm:$0xff] %v1968
        %v2235 = vld [vmem:[#allocation1] sm:$0xff]
        %2236 = vst [vmem:[#allocation1] ss:$9 sm:$0xff] %v1969
        %2237 = vst [vmem:[%s2194] ss:$9 sm:$0xff] %v1970
        %2238 = vst [vmem:[%s2196] ss:$9 sm:$0xff] %v1971
        %2239 = vst [vmem:[%s2198] ss:$9 sm:$0xff] %v1972
        %2240 = vst [vmem:[%s2200] ss:$9 sm:$0xff] %v1973
        %2241 = vst [vmem:[%s2202] ss:$9 sm:$0xff] %v1974
        %2242 = vst [vmem:[%s2204] ss:$9 sm:$0xff] %v1975
        %2243 = vst [vmem:[%s2206] ss:$9 sm:$0xff] %v1976
        %v2244 = vld [vmem:[#allocation1] sm:$0xff]
        %2245 = vst [vmem:[#allocation1] ss:$9 sm:$0xff] %v1977
        %2246 = vst [vmem:[%s2194] ss:$9 sm:$0xff] %v1978
        %2247 = vst [vmem:[%s2196] ss:$9 sm:$0xff] %v1979
        %2248 = vst [vmem:[%s2198] ss:$9 sm:$0xff] %v1980
        %2249 = vst [vmem:[%s2200] ss:$9 sm:$0xff] %v1981
        %2250 = vst [vmem:[%s2202] ss:$9 sm:$0xff] %v1982
        %2251 = vst [vmem:[%s2204] ss:$9 sm:$0xff] %v1983
        %2252 = vst [vmem:[%s2206] ss:$9 sm:$0xff] %v1984
        %v2253 = vld [vmem:[#allocation1] sm:$0xff]
        %2254 = vst [vmem:[#allocation1] ss:$9 sm:$0xff] %v1985
        %2255 = vst [vmem:[%s2194] ss:$9 sm:$0xff] %v1986
        %2256 = vst [vmem:[%s2196] ss:$9 sm:$0xff] %v1987
        %2257 = vst [vmem:[%s2198] ss:$9 sm:$0xff] %v1988
        %2258 = vst [vmem:[%s2200] ss:$9 sm:$0xff] %v1989
        %2259 = vst [vmem:[%s2202] ss:$9 sm:$0xff] %v1990
        %2260 = vst [vmem:[%s2204] ss:$9 sm:$0xff] %v1991
        %2261 = vst [vmem:[%s2206] ss:$9 sm:$0xff] %v1992
        %v2262 = vld [vmem:[#allocation1] sm:$0xff]
        %2263 = vst [vmem:[#allocation1] ss:$9 sm:$0xff] %v1993
        %2264 = vst [vmem:[%s2194] ss:$9 sm:$0xff] %v1994
        %2265 = vst [vmem:[%s2196] ss:$9 sm:$0xff] %v1995
        %2266 = vst [vmem:[%s2198] ss:$9 sm:$0xff] %v1996
        %2267 = vst [vmem:[%s2200] ss:$9 sm:$0xff] %v1997
        %2268 = vst [vmem:[%s2202] ss:$9 sm:$0xff] %v1998
        %2269 = vst [vmem:[%s2204] ss:$9 sm:$0xff] %v1999
        %2270 = vst [vmem:[%s2206] ss:$9 sm:$0xff] %v2000
        %v2271 = vld [vmem:[#allocation1] sm:$0xff]
        %2272 = vst [vmem:[#allocation1] ss:$9 sm:$0xff] %v2001
        %2273 = vst [vmem:[%s2194] ss:$9 sm:$0xff] %v2002
        %2274 = vst [vmem:[%s2196] ss:$9 sm:$0xff] %v2003
        %2275 = vst [vmem:[%s2198] ss:$9 sm:$0xff] %v2004
        %2276 = vst [vmem:[%s2200] ss:$9 sm:$0xff] %v2005
        %2277 = vst [vmem:[%s2202] ss:$9 sm:$0xff] %v2006
        %2278 = vst [vmem:[%s2204] ss:$9 sm:$0xff] %v2007
        %2279 = vst [vmem:[%s2206] ss:$9 sm:$0xff] %v2008
        %v2280 = vld [vmem:[#allocation1] sm:$0xff]
        %2281 = vst [vmem:[#allocation1] ss:$9 sm:$0xff] %v2009
        %2282 = vst [vmem:[%s2194] ss:$9 sm:$0xff] %v2010
        %2283 = vst [vmem:[%s2196] ss:$9 sm:$0xff] %v2011
        %2284 = vst [vmem:[%s2198] ss:$9 sm:$0xff] %v2012
        %2285 = vst [vmem:[%s2200] ss:$9 sm:$0xff] %v2013
        %2286 = vst [vmem:[%s2202] ss:$9 sm:$0xff] %v2014
        %2287 = vst [vmem:[%s2204] ss:$9 sm:$0xff] %v2015
        %2288 = vst [vmem:[%s2206] ss:$9 sm:$0xff] %v2016
        %v2289 = vld [vmem:[#allocation1] sm:$0xff]
        %2290 = vst [vmem:[#allocation1] ss:$9 sm:$0xff] %v2017
        %2291 = vst [vmem:[%s2194] ss:$9 sm:$0xff] %v2018
        %2292 = vst [vmem:[%s2196] ss:$9 sm:$0xff] %v2019
        %2293 = vst [vmem:[%s2198] ss:$9 sm:$0xff] %v2020
        %2294 = vst [vmem:[%s2200] ss:$9 sm:$0xff] %v2021
        %2295 = vst [vmem:[%s2202] ss:$9 sm:$0xff] %v2022
        %2296 = vst [vmem:[%s2204] ss:$9 sm:$0xff] %v2023
        %2297 = vst [vmem:[%s2206] ss:$9 sm:$0xff] %v2024
        %v2298 = vld [vmem:[#allocation1] sm:$0xff]
        %2299 = vst [vmem:[#allocation1] ss:$9 sm:$0xff] %v2025
        %2300 = vst [vmem:[%s2194] ss:$9 sm:$0xff] %v2026
        %2301 = vst [vmem:[%s2196] ss:$9 sm:$0xff] %v2027
        %2302 = vst [vmem:[%s2198] ss:$9 sm:$0xff] %v2028
        %2303 = vst [vmem:[%s2200] ss:$9 sm:$0xff] %v2029
        %2304 = vst [vmem:[%s2202] ss:$9 sm:$0xff] %v2030
        %2305 = vst [vmem:[%s2204] ss:$9 sm:$0xff] %v2031
        %2306 = vst [vmem:[%s2206] ss:$9 sm:$0xff] %v2032
        %v2307 = vld [vmem:[#allocation1] sm:$0xff]
        %2308 = vst [vmem:[#allocation1] ss:$9 sm:$0xff] %v2033
        %2309 = vst [vmem:[%s2194] ss:$9 sm:$0xff] %v2034
        %2310 = vst [vmem:[%s2196] ss:$9 sm:$0xff] %v2035
        %2311 = vst [vmem:[%s2198] ss:$9 sm:$0xff] %v2036
        %2312 = vst [vmem:[%s2200] ss:$9 sm:$0xff] %v2037
        %2313 = vst [vmem:[%s2202] ss:$9 sm:$0xff] %v2038
        %2314 = vst [vmem:[%s2204] ss:$9 sm:$0xff] %v2039
        %2315 = vst [vmem:[%s2206] ss:$9 sm:$0xff] %v2040
        %v2316 = vld [vmem:[#allocation1] sm:$0xff]
        %2317 = vst [vmem:[#allocation1] ss:$9 sm:$0xff] %v2041
        %2318 = vst [vmem:[%s2194] ss:$9 sm:$0xff] %v2042
        %2319 = vst [vmem:[%s2196] ss:$9 sm:$0xff] %v2043
        %2320 = vst [vmem:[%s2198] ss:$9 sm:$0xff] %v2044
        %2321 = vst [vmem:[%s2200] ss:$9 sm:$0xff] %v2045
        %2322 = vst [vmem:[%s2202] ss:$9 sm:$0xff] %v2046
        %2323 = vst [vmem:[%s2204] ss:$9 sm:$0xff] %v2047
        %2324 = vst [vmem:[%s2206] ss:$9 sm:$0xff] %v2048
        %v2325 = vld [vmem:[#allocation1] sm:$0xff]
        %2326 = vst [vmem:[#allocation1] ss:$9 sm:$0xff] %v2049
        %2327 = vst [vmem:[%s2194] ss:$9 sm:$0xff] %v2050
        %2328 = vst [vmem:[%s2196] ss:$9 sm:$0xff] %v2051
        %2329 = vst [vmem:[%s2198] ss:$9 sm:$0xff] %v2052
        %2330 = vst [vmem:[%s2200] ss:$9 sm:$0xff] %v2053
        %2331 = vst [vmem:[%s2202] ss:$9 sm:$0xff] %v2054
        %2332 = vst [vmem:[%s2204] ss:$9 sm:$0xff] %v2055
        %2333 = vst [vmem:[%s2206] ss:$9 sm:$0xff] %v2056
        %v2334 = vld [vmem:[#allocation1] sm:$0xff]
        %2335 = vst [vmem:[#allocation1] ss:$9 sm:$0xff] %v2057
        %2336 = vst [vmem:[%s2194] ss:$9 sm:$0xff] %v2058
        %2337 = vst [vmem:[%s2196] ss:$9 sm:$0xff] %v2059
        %2338 = vst [vmem:[%s2198] ss:$9 sm:$0xff] %v2060
        %2339 = vst [vmem:[%s2200] ss:$9 sm:$0xff] %v2061
        %2340 = vst [vmem:[%s2202] ss:$9 sm:$0xff] %v2062
        %2341 = vst [vmem:[%s2204] ss:$9 sm:$0xff] %v2063
        %2342 = vst [vmem:[%s2206] ss:$9 sm:$0xff] %v2064
        %v2343 = vld [vmem:[#allocation1] sm:$0xff]
        %2344 = vst [vmem:[#allocation1] ss:$9 sm:$0xff] %v2065
        %2345 = vst [vmem:[%s2194] ss:$9 sm:$0xff] %v2066
        %2346 = vst [vmem:[%s2196] ss:$9 sm:$0xff] %v2067
        %2347 = vst [vmem:[%s2198] ss:$9 sm:$0xff] %v2068
        %2348 = vst [vmem:[%s2200] ss:$9 sm:$0xff] %v2069
        %2349 = vst [vmem:[%s2202] ss:$9 sm:$0xff] %v2070
        %2350 = vst [vmem:[%s2204] ss:$9 sm:$0xff] %v2071
        %2351 = vst [vmem:[%s2206] ss:$9 sm:$0xff] %v2072
        %v2352 = vld [vmem:[#allocation1] sm:$0xff]
        %2353 = vst [vmem:[#allocation1] ss:$9 sm:$0xff] %v2073
        %2354 = vst [vmem:[%s2194] ss:$9 sm:$0xff] %v2074
        %2355 = vst [vmem:[%s2196] ss:$9 sm:$0xff] %v2075
        %2356 = vst [vmem:[%s2198] ss:$9 sm:$0xff] %v2076
        %2357 = vst [vmem:[%s2200] ss:$9 sm:$0xff] %v2077
        %2358 = vst [vmem:[%s2202] ss:$9 sm:$0xff] %v2078
        %2359 = vst [vmem:[%s2204] ss:$9 sm:$0xff] %v2079
        %2360 = vst [vmem:[%s2206] ss:$9 sm:$0xff] %v2080
        %v2361 = vld [vmem:[#allocation1] sm:$0xff]
        %2362 = vst [vmem:[#allocation1] ss:$9 sm:$0xff] %v2081
        %2363 = vst [vmem:[%s2194] ss:$9 sm:$0xff] %v2082
        %2364 = vst [vmem:[%s2196] ss:$9 sm:$0xff] %v2083
        %2365 = vst [vmem:[%s2198] ss:$9 sm:$0xff] %v2084
        %2366 = vst [vmem:[%s2200] ss:$9 sm:$0xff] %v2085
        %2367 = vst [vmem:[%s2202] ss:$9 sm:$0xff] %v2086
        %2368 = vst [vmem:[%s2204] ss:$9 sm:$0xff] %v2087
        %2369 = vst [vmem:[%s2206] ss:$9 sm:$0xff] %v2088
        %v2370 = vld [vmem:[#allocation1] sm:$0xff]
        %2371 = vst [vmem:[#allocation1] ss:$9 sm:$0xff] %v2089
        %2372 = vst [vmem:[%s2194] ss:$9 sm:$0xff] %v2090
        %2373 = vst [vmem:[%s2196] ss:$9 sm:$0xff] %v2091
        %2374 = vst [vmem:[%s2198] ss:$9 sm:$0xff] %v2092
        %2375 = vst [vmem:[%s2200] ss:$9 sm:$0xff] %v2093
        %2376 = vst [vmem:[%s2202] ss:$9 sm:$0xff] %v2094
        %2377 = vst [vmem:[%s2204] ss:$9 sm:$0xff] %v2095
        %2378 = vst [vmem:[%s2206] ss:$9 sm:$0xff] %v2096
        %v2379 = vld [vmem:[#allocation1] sm:$0xff]
        %2380 = vst [vmem:[#allocation1] ss:$9 sm:$0xff] %v2097
        %2381 = vst [vmem:[%s2194] ss:$9 sm:$0xff] %v2098
        %2382 = vst [vmem:[%s2196] ss:$9 sm:$0xff] %v2099
        %2383 = vst [vmem:[%s2198] ss:$9 sm:$0xff] %v2100
        %2384 = vst [vmem:[%s2200] ss:$9 sm:$0xff] %v2101
        %2385 = vst [vmem:[%s2202] ss:$9 sm:$0xff] %v2102
        %2386 = vst [vmem:[%s2204] ss:$9 sm:$0xff] %v2103
        %2387 = vst [vmem:[%s2206] ss:$9 sm:$0xff] %v2104
        %v2388 = vld [vmem:[#allocation1] sm:$0xff]
        %2389 = vst [vmem:[#allocation1] ss:$9 sm:$0xff] %v2105
        %2390 = vst [vmem:[%s2194] ss:$9 sm:$0xff] %v2106
        %2391 = vst [vmem:[%s2196] ss:$9 sm:$0xff] %v2107
        %2392 = vst [vmem:[%s2198] ss:$9 sm:$0xff] %v2108
        %2393 = vst [vmem:[%s2200] ss:$9 sm:$0xff] %v2109
        %2394 = vst [vmem:[%s2202] ss:$9 sm:$0xff] %v2110
        %2395 = vst [vmem:[%s2204] ss:$9 sm:$0xff] %v2111
        %2396 = vst [vmem:[%s2206] ss:$9 sm:$0xff] %v2112
        %v2397 = vld [vmem:[#allocation1] sm:$0xff]
        %2398 = vst [vmem:[#allocation1] ss:$9 sm:$0xff] %v2113
        %2399 = vst [vmem:[%s2194] ss:$9 sm:$0xff] %v2114
        %2400 = vst [vmem:[%s2196] ss:$9 sm:$0xff] %v2115
        %2401 = vst [vmem:[%s2198] ss:$9 sm:$0xff] %v2116
        %2402 = vst [vmem:[%s2200] ss:$9 sm:$0xff] %v2117
        %2403 = vst [vmem:[%s2202] ss:$9 sm:$0xff] %v2118
        %2404 = vst [vmem:[%s2204] ss:$9 sm:$0xff] %v2119
        %2405 = vst [vmem:[%s2206] ss:$9 sm:$0xff] %v2120
        %v2406 = vld [vmem:[#allocation1] sm:$0xff]
        %2407 = vst [vmem:[#allocation1] ss:$9 sm:$0xff] %v2121
        %2408 = vst [vmem:[%s2194] ss:$9 sm:$0xff] %v2122
        %2409 = vst [vmem:[%s2196] ss:$9 sm:$0xff] %v2123
        %2410 = vst [vmem:[%s2198] ss:$9 sm:$0xff] %v2124
        %2411 = vst [vmem:[%s2200] ss:$9 sm:$0xff] %v2125
        %2412 = vst [vmem:[%s2202] ss:$9 sm:$0xff] %v2126
        %2413 = vst [vmem:[%s2204] ss:$9 sm:$0xff] %v2127
        %2414 = vst [vmem:[%s2206] ss:$9 sm:$0xff] %v2128
        %v2415 = vld [vmem:[#allocation1] sm:$0xff]
        %2416 = vst [vmem:[#allocation1] ss:$9 sm:$0xff] %v2129
        %2417 = vst [vmem:[%s2194] ss:$9 sm:$0xff] %v2130
        %2418 = vst [vmem:[%s2196] ss:$9 sm:$0xff] %v2131
        %2419 = vst [vmem:[%s2198] ss:$9 sm:$0xff] %v2132
        %2420 = vst [vmem:[%s2200] ss:$9 sm:$0xff] %v2133
        %2421 = vst [vmem:[%s2202] ss:$9 sm:$0xff] %v2134
        %2422 = vst [vmem:[%s2204] ss:$9 sm:$0xff] %v2135
        %2423 = vst [vmem:[%s2206] ss:$9 sm:$0xff] %v2136
        %v2424 = vld [vmem:[#allocation1] sm:$0xff]
        %2425 = vst [vmem:[#allocation1] ss:$9 sm:$0xff] %v2137
        %2426 = vst [vmem:[%s2194] ss:$9 sm:$0xff] %v2138
        %2427 = vst [vmem:[%s2196] ss:$9 sm:$0xff] %v2139
        %2428 = vst [vmem:[%s2198] ss:$9 sm:$0xff] %v2140
        %2429 = vst [vmem:[%s2200] ss:$9 sm:$0xff] %v2141
        %2430 = vst [vmem:[%s2202] ss:$9 sm:$0xff] %v2142
        %2431 = vst [vmem:[%s2204] ss:$9 sm:$0xff] %v2143
        %2432 = vst [vmem:[%s2206] ss:$9 sm:$0xff] %v2144
        %v2433 = vld [vmem:[#allocation1] sm:$0xff]
        %2434 = vst [vmem:[#allocation1] ss:$9 sm:$0xff] %v2145
        %2435 = vst [vmem:[%s2194] ss:$9 sm:$0xff] %v2146
        %2436 = vst [vmem:[%s2196] ss:$9 sm:$0xff] %v2147
        %2437 = vst [vmem:[%s2198] ss:$9 sm:$0xff] %v2148
        %2438 = vst [vmem:[%s2200] ss:$9 sm:$0xff] %v2149
        %2439 = vst [vmem:[%s2202] ss:$9 sm:$0xff] %v2150
        %2440 = vst [vmem:[%s2204] ss:$9 sm:$0xff] %v2151
        %2441 = vst [vmem:[%s2206] ss:$9 sm:$0xff] %v2152
        %v2442 = vld [vmem:[#allocation1] sm:$0xff]
        %2443 = vst [vmem:[#allocation1] ss:$9 sm:$0xff] %v2153
        %2444 = vst [vmem:[%s2194] ss:$9 sm:$0xff] %v2154
        %2445 = vst [vmem:[%s2196] ss:$9 sm:$0xff] %v2155
        %2446 = vst [vmem:[%s2198] ss:$9 sm:$0xff] %v2156
        %2447 = vst [vmem:[%s2200] ss:$9 sm:$0xff] %v2157
        %2448 = vst [vmem:[%s2202] ss:$9 sm:$0xff] %v2158
        %2449 = vst [vmem:[%s2204] ss:$9 sm:$0xff] %v2159
        %2450 = vst [vmem:[%s2206] ss:$9 sm:$0xff] %v2160
        %v2451 = vld [vmem:[#allocation1] sm:$0xff]
        %2452 = vst [vmem:[#allocation1] ss:$9 sm:$0xff] %v2161
        %2453 = vst [vmem:[%s2194] ss:$9 sm:$0xff] %v2162
        %2454 = vst [vmem:[%s2196] ss:$9 sm:$0xff] %v2163
        %2455 = vst [vmem:[%s2198] ss:$9 sm:$0xff] %v2164
        %2456 = vst [vmem:[%s2200] ss:$9 sm:$0xff] %v2165
        %2457 = vst [vmem:[%s2202] ss:$9 sm:$0xff] %v2166
        %2458 = vst [vmem:[%s2204] ss:$9 sm:$0xff] %v2167
        %2459 = vst [vmem:[%s2206] ss:$9 sm:$0xff] %v2168
        %v2460 = vld [vmem:[#allocation1] sm:$0xff]
        %2461 = vst [vmem:[#allocation1] ss:$9 sm:$0xff] %v2169
        %2462 = vst [vmem:[%s2194] ss:$9 sm:$0xff] %v2170
        %2463 = vst [vmem:[%s2196] ss:$9 sm:$0xff] %v2171
        %2464 = vst [vmem:[%s2198] ss:$9 sm:$0xff] %v2172
        %2465 = vst [vmem:[%s2200] ss:$9 sm:$0xff] %v2173
        %2466 = vst [vmem:[%s2202] ss:$9 sm:$0xff] %v2174
        %2467 = vst [vmem:[%s2204] ss:$9 sm:$0xff] %v2175
        %2468 = vst [vmem:[%s2206] ss:$9 sm:$0xff] %v2176
        %v2469 = vld [vmem:[#allocation1] sm:$0xff]
        %2470 = vst [vmem:[#allocation1] ss:$9 sm:$0xff] %v2177
        %2471 = vst [vmem:[%s2194] ss:$9 sm:$0xff] %v2178
        %2472 = vst [vmem:[%s2196] ss:$9 sm:$0xff] %v2179
        %2473 = vst [vmem:[%s2198] ss:$9 sm:$0xff] %v2180
        %2474 = vst [vmem:[%s2200] ss:$9 sm:$0xff] %v2181
        %2475 = vst [vmem:[%s2202] ss:$9 sm:$0xff] %v2182
        %2476 = vst [vmem:[%s2204] ss:$9 sm:$0xff] %v2183
        %2477 = vst [vmem:[%s2206] ss:$9 sm:$0xff] %v2184
        %v2478 = vld [vmem:[#allocation1] sm:$0xff]
        %2479 = vst [vmem:[#allocation1] ss:$9 sm:$0xff] %v2185
        %2480 = vst [vmem:[%s2194] ss:$9 sm:$0xff] %v2186
        %2481 = vst [vmem:[%s2196] ss:$9 sm:$0xff] %v2187
        %2482 = vst [vmem:[%s2198] ss:$9 sm:$0xff] %v2188
        %2483 = vst [vmem:[%s2200] ss:$9 sm:$0xff] %v2189
        %2484 = vst [vmem:[%s2202] ss:$9 sm:$0xff] %v2190
        %2485 = vst [vmem:[%s2204] ss:$9 sm:$0xff] %v2191
        %2486 = vst [vmem:[%s2206] ss:$9 sm:$0xff] %v2192
        %v2487 = vld [vmem:[#allocation1] sm:$0xff]
        %2488 = vset.pattern.permute.xlu0 0
        %2489 = vperm.xlu0 %2488, %v2208
        %v2490 = vpop.permute.xlu0 %2489
        %2491 = vset.pattern.permute.xlu0 0
        %2492 = vperm.xlu0 %2491, %v2217
        %v2493 = vpop.permute.xlu0 %2492
        %2494 = vset.pattern.permute.xlu0 0
        %2495 = vperm.xlu0 %2494, %v2226
        %v2496 = vpop.permute.xlu0 %2495
        %2497 = vset.pattern.permute.xlu0 0
        %2498 = vperm.xlu0 %2497, %v2235
        %v2499 = vpop.permute.xlu0 %2498
        %2500 = vset.pattern.permute.xlu0 0
        %2501 = vperm.xlu0 %2500, %v2244
        %v2502 = vpop.permute.xlu0 %2501
        %2503 = vset.pattern.permute.xlu0 0
        %2504 = vperm.xlu0 %2503, %v2253
        %v2505 = vpop.permute.xlu0 %2504
        %2506 = vset.pattern.permute.xlu0 0
        %2507 = vperm.xlu0 %2506, %v2262
        %v2508 = vpop.permute.xlu0 %2507
        %2509 = vset.pattern.permute.xlu0 0
        %2510 = vperm.xlu0 %2509, %v2271
        %v2511 = vpop.permute.xlu0 %2510
        %2512 = vset.pattern.permute.xlu0 0
        %2513 = vperm.xlu0 %2512, %v2280
        %v2514 = vpop.permute.xlu0 %2513
        %2515 = vset.pattern.permute.xlu0 0
        %2516 = vperm.xlu0 %2515, %v2289
        %v2517 = vpop.permute.xlu0 %2516
        %2518 = vset.pattern.permute.xlu0 0
        %2519 = vperm.xlu0 %2518, %v2298
        %v2520 = vpop.permute.xlu0 %2519
        %2521 = vset.pattern.permute.xlu0 0
        %2522 = vperm.xlu0 %2521, %v2307
        %v2523 = vpop.permute.xlu0 %2522
        %2524 = vset.pattern.permute.xlu0 0
        %2525 = vperm.xlu0 %2524, %v2316
        %v2526 = vpop.permute.xlu0 %2525
        %2527 = vset.pattern.permute.xlu0 0
        %2528 = vperm.xlu0 %2527, %v2325
        %v2529 = vpop.permute.xlu0 %2528
        %2530 = vset.pattern.permute.xlu0 0
        %2531 = vperm.xlu0 %2530, %v2334
        %v2532 = vpop.permute.xlu0 %2531
        %2533 = vset.pattern.permute.xlu0 0
        %2534 = vperm.xlu0 %2533, %v2343
        %v2535 = vpop.permute.xlu0 %2534
        %2536 = vset.pattern.permute.xlu0 0
        %2537 = vperm.xlu0 %2536, %v2352
        %v2538 = vpop.permute.xlu0 %2537
        %2539 = vset.pattern.permute.xlu0 0
        %2540 = vperm.xlu0 %2539, %v2361
        %v2541 = vpop.permute.xlu0 %2540
        %2542 = vset.pattern.permute.xlu0 0
        %2543 = vperm.xlu0 %2542, %v2370
        %v2544 = vpop.permute.xlu0 %2543
        %2545 = vset.pattern.permute.xlu0 0
        %2546 = vperm.xlu0 %2545, %v2379
        %v2547 = vpop.permute.xlu0 %2546
        %2548 = vset.pattern.permute.xlu0 0
        %2549 = vperm.xlu0 %2548, %v2388
        %v2550 = vpop.permute.xlu0 %2549
        %2551 = vset.pattern.permute.xlu0 0
        %2552 = vperm.xlu0 %2551, %v2397
        %v2553 = vpop.permute.xlu0 %2552
        %2554 = vset.pattern.permute.xlu0 0
        %2555 = vperm.xlu0 %2554, %v2406
        %v2556 = vpop.permute.xlu0 %2555
        %2557 = vset.pattern.permute.xlu0 0
        %2558 = vperm.xlu0 %2557, %v2415
        %v2559 = vpop.permute.xlu0 %2558
        %2560 = vset.pattern.permute.xlu0 0
        %2561 = vperm.xlu0 %2560, %v2424
        %v2562 = vpop.permute.xlu0 %2561
        %2563 = vset.pattern.permute.xlu0 0
        %2564 = vperm.xlu0 %2563, %v2433
        %v2565 = vpop.permute.xlu0 %2564
        %2566 = vset.pattern.permute.xlu0 0
        %2567 = vperm.xlu0 %2566, %v2442
        %v2568 = vpop.permute.xlu0 %2567
        %2569 = vset.pattern.permute.xlu0 0
        %2570 = vperm.xlu0 %2569, %v2451
        %v2571 = vpop.permute.xlu0 %2570
        %2572 = vset.pattern.permute.xlu0 0
        %2573 = vperm.xlu0 %2572, %v2460
        %v2574 = vpop.permute.xlu0 %2573
        %2575 = vset.pattern.permute.xlu0 0
        %2576 = vperm.xlu0 %2575, %v2469
        %v2577 = vpop.permute.xlu0 %2576
        %2578 = vset.pattern.permute.xlu0 0
        %2579 = vperm.xlu0 %2578, %v2478
        %v2580 = vpop.permute.xlu0 %2579
        %2581 = vset.pattern.permute.xlu0 0
        %2582 = vperm.xlu0 %2581, %v2487
        %v2583 = vpop.permute.xlu0 %2582
        %v2584 = vlaneseq
        %v2585 = vand.u32 %v2584, 127
        %v2586 = vperm.slane %v2490, %v2585
        %v2587 = vadd.s32 %v2585, 4294967288
        %v2588 = vperm.slane %v2493, %v2587
        %vm2589 = vcmask 130112
        %v2590 = vsel %vm2589, %v2588, %v2586
        %v2591 = vadd.s32 %v2585, 4294967280
        %v2592 = vperm.slane %v2496, %v2591
        %vm2593 = vcmask 195712
        %v2594 = vsel %vm2593, %v2592, %v2590
        %v2595 = vadd.s32 %v2585, 4294967272
        %v2596 = vperm.slane %v2499, %v2595
        %vm2597 = vcmask 261312
        %v2598 = vsel %vm2597, %v2596, %v2594
        %v2599 = vadd.s32 %v2585, 4294967264
        %v2600 = vperm.slane %v2502, %v2599
        %vm2601 = vcmask 326912
        %v2602 = vsel %vm2601, %v2600, %v2598
        %v2603 = vadd.s32 %v2585, 4294967256
        %v2604 = vperm.slane %v2505, %v2603
        %vm2605 = vcmask 392512
        %v2606 = vsel %vm2605, %v2604, %v2602
        %v2607 = vadd.s32 %v2585, 4294967248
        %v2608 = vperm.slane %v2508, %v2607
        %vm2609 = vcmask 458112
        %v2610 = vsel %vm2609, %v2608, %v2606
        %v2611 = vadd.s32 %v2585, 4294967240
        %v2612 = vperm.slane %v2511, %v2611
        %vm2613 = vcmask 523712
        %v2614 = vsel %vm2613, %v2612, %v2610
        %v2615 = vadd.s32 %v2585, 4294967232
        %v2616 = vperm.slane %v2514, %v2615
        %vm2617 = vcmask 589312
        %v2618 = vsel %vm2617, %v2616, %v2614
        %v2619 = vadd.s32 %v2585, 4294967224
        %v2620 = vperm.slane %v2517, %v2619
        %vm2621 = vcmask 654912
        %v2622 = vsel %vm2621, %v2620, %v2618
        %v2623 = vadd.s32 %v2585, 4294967216
        %v2624 = vperm.slane %v2520, %v2623
        %vm2625 = vcmask 720512
        %v2626 = vsel %vm2625, %v2624, %v2622
        %v2627 = vadd.s32 %v2585, 4294967208
        %v2628 = vperm.slane %v2523, %v2627
        %vm2629 = vcmask 786112
        %v2630 = vsel %vm2629, %v2628, %v2626
        %v2631 = vadd.s32 %v2585, 4294967200
        %v2632 = vperm.slane %v2526, %v2631
        %vm2633 = vcmask 851712
        %v2634 = vsel %vm2633, %v2632, %v2630
        %v2635 = vadd.s32 %v2585, 4294967192
        %v2636 = vperm.slane %v2529, %v2635
        %vm2637 = vcmask 917312
        %v2638 = vsel %vm2637, %v2636, %v2634
        %v2639 = vadd.s32 %v2585, 4294967184
        %v2640 = vperm.slane %v2532, %v2639
        %vm2641 = vcmask 982912
        %v2642 = vsel %vm2641, %v2640, %v2638
        %v2643 = vadd.s32 %v2585, 4294967176
        %v2644 = vperm.slane %v2535, %v2643
        %vm2645 = vcmask 1048512
        %v2646 = vsel %vm2645, %v2644, %v2642
        %v2647 = vperm.slane %v2538, %v2585
        %v2648 = vperm.slane %v2541, %v2587
        %v2649 = vsel %vm2589, %v2648, %v2647
        %v2650 = vperm.slane %v2544, %v2591
        %v2651 = vsel %vm2593, %v2650, %v2649
        %v2652 = vperm.slane %v2547, %v2595
        %v2653 = vsel %vm2597, %v2652, %v2651
        %v2654 = vperm.slane %v2550, %v2599
        %v2655 = vsel %vm2601, %v2654, %v2653
        %v2656 = vperm.slane %v2553, %v2603
        %v2657 = vsel %vm2605, %v2656, %v2655
        %v2658 = vperm.slane %v2556, %v2607
        %v2659 = vsel %vm2609, %v2658, %v2657
        %v2660 = vperm.slane %v2559, %v2611
        %v2661 = vsel %vm2613, %v2660, %v2659
        %v2662 = vperm.slane %v2562, %v2615
        %v2663 = vsel %vm2617, %v2662, %v2661
        %v2664 = vperm.slane %v2565, %v2619
        %v2665 = vsel %vm2621, %v2664, %v2663
        %v2666 = vperm.slane %v2568, %v2623
        %v2667 = vsel %vm2625, %v2666, %v2665
        %v2668 = vperm.slane %v2571, %v2627
        %v2669 = vsel %vm2629, %v2668, %v2667
        %v2670 = vperm.slane %v2574, %v2631
        %v2671 = vsel %vm2633, %v2670, %v2669
        %v2672 = vperm.slane %v2577, %v2635
        %v2673 = vsel %vm2637, %v2672, %v2671
        %v2674 = vperm.slane %v2580, %v2639
        %v2675 = vsel %vm2641, %v2674, %v2673
        %v2676 = vperm.slane %v2583, %v2643
        %v2677 = vsel %vm2645, %v2676, %v2675
        %v2678 = vrot.slane %v2677, 7
        %vm2679 = vcmask 1040384
        %v2680 = vsel %vm2679, %v2646, %v2678
        %v2682 = vlaneseq
        %vm2683 = vcmp.ge.s32.totalorder %v2682, 0
        %vm2684 = vcmp.lt.s32.totalorder %v2682, 256
        %vm2685 = vmand %vm2683, %vm2684
        %2686 = vst.msk [vmem:[%s289] sm:$0x3] %vm2685, %v2680
        %p2687 = scmp.lt.s32.totalorder %s23, 1
        %s2688 = scalar_select %p2687, %s23, 1
        %s2689 = smul.addr %s2688, 2
        %s2690 = scalar_lea.vmem %s5, %s2689
        // Predicated region
        $region49: #{feed_forward_score.1} parent=39 // pred_check
          %p2691 = pneg %p156
        $region50: #{feed_forward_score.1} parent=39 // pred_check_branch
          %2693 = sbr.rel (%p2691) target = $region52
        $region51: #{feed_forward_score.1} parent=39 // pred_region
          _
        $region52: #{feed_forward_score.1} parent=39 // pred_fallthru
          _
      $region40: #{feed_forward_score.1} parent=5 // pred_fallthru
        _
      %p2694 = scmp.le.s32.totalorder 2, %s18
      // Predicated region
      $region53: #{feed_forward_score.1} parent=5 // pred_check
        %p2695 = pneg %p2694
      $region54: #{feed_forward_score.1} parent=5 // pred_check_branch
        %2697 = sbr.rel (%p2695) target = $region56
      $region55: #{feed_forward_score.1} parent=5 // pred_region
        %s2698 = ssub.s32 %s18, 2
        // Predicated region
        $region57: #{feed_forward_score.1} parent=55 // pred_check
          %p2699 = pneg %p162
        $region58: #{feed_forward_score.1} parent=55 // pred_check_branch
          %2701 = sbr.rel (%p2699) target = $region60
        $region59: #{feed_forward_score.1} parent=55 // pred_region
          %p2702 = scmp.lt.s32.totalorder %s24, 1
          %s2703 = scalar_select %p2702, %s24, 1
          %s2704 = smul.addr %s2703, 2
          %s2705 = scalar_lea.vmem %s5, %s2704
        $region60: #{feed_forward_score.1} parent=55 // pred_fallthru
          _
      $region56: #{feed_forward_score.1} parent=5 // pred_fallthru
        _
    $region6: #{feed_forward_score.1} parent=1 // loop_footer
      %s22 = sadd.s32 1, %s18
    $region7: #{feed_forward_score.1} parent=1 // loop_footer_branch
      %17 = sbr.rel target = $region3
    $region8: #{feed_forward_score.1} parent=1 // loop_exit
      _
    %2706 = vsyncpa [#allocation4], 1
    %s2707 = scalar_lea.sflag [#allocation4], 1
    %2708 = vsyncpa %s2707, 1
    %2709 = vsyncpa [#allocation6], 1
    %s2710 = scalar_lea.sflag [#allocation6], 1
    %2711 = vsyncpa %s2710, 1

</llo_original>
